<compile_context>
chip_gen: v5e
topology: v5e:2x2
jax: 0.10.0
libtpu: 0.0.40
codegen_flags: <defaults>
</compile_context>

<pallas_src>
import functools
import math

import jax
import jax.numpy as jnp
from jax.experimental import pallas as pl
from jax.experimental.pallas import tpu as pltpu


def _encoder_stack_kernel(x_ref, mask_ref,
                          wqkv_ref, bqkv_ref, wo_ref,
                          w1_ref, b1_ref, w2_ref,
                          vecs_ref,
                          out_ref,
                          act_ref,
                          *, num_heads, key_size, value_size,
                          eps=1e-5, approx_recip=True):
    layer = pl.program_id(1)
    num_layers = pl.num_programs(1)

    TB, S, H = x_ref.shape
    M = TB * S                                 # fused batch-tile sequence
    nh, dk, dv = num_heads, key_size, value_size
    dh = 2 * dk + dv                           # per-head fused q|k|v width
    dvt = nh * dv

    # Load the input activation on the first layer; afterwards the activation
    # is carried across the layer grid axis in VMEM scratch (no per-layer HBM
    # round trips).
    @pl.when(layer == 0)
    def _():
        act_ref[...] = x_ref[...].reshape(M, H).astype(jnp.float32)

    x = act_ref[...]                           # (M, H) f32 residual stream
    x_bf = x.astype(jnp.bfloat16)
    mask_add = mask_ref[0]                     # (M, M): block-diag + key pad

    # packed per-layer (1, H) vectors: [bo, ln1_g, ln1_b, b2, ln2_g, ln2_b]
    vecs = vecs_ref[0]
    bo, ln1g, ln1b = vecs[0:1], vecs[1:2], vecs[2:3]
    b2, ln2g, ln2b = vecs[3:4], vecs[4:5], vecs[5:6]

    # ---- fused Q|K|V projection: one wide MXU matmul (bf16 in, f32 acc).
    # Weight columns are head-major ([h0:(q|k|v), h1:(q|k|v), ...]) so a
    # single relayout of the combined tensor gives head-major q/k/v.
    qkv = jnp.dot(x_bf, wqkv_ref[0],
                  preferred_element_type=jnp.float32) + bqkv_ref[0]   # (M, nh*dh)
    qkv_h = jnp.transpose(qkv.reshape(M, nh, dh), (1, 0, 2))          # (nh, M, dh)

    scale = 1.0 / math.sqrt(dk)
    q3 = qkv_h[:, :, :dk] * scale              # fold 1/sqrt(dk) into q
    k3 = qkv_h[:, :, dk:2 * dk]
    v3 = qkv_h[:, :, 2 * dk:]

    # ---- batched-head attention over the fused (TB*S)-long sequence ----
    scores = jnp.einsum('hqd,hkd->hqk',
                        q3.astype(jnp.bfloat16), k3.astype(jnp.bfloat16),
                        preferred_element_type=jnp.float32)           # (nh, M, M)
    scores = scores + mask_add                 # (M, M) broadcasts over heads
    scores = scores - jnp.max(scores, axis=-1, keepdims=True)
    p = jnp.exp(scores)
    denom = jnp.sum(p, axis=-1, keepdims=True)
    if approx_recip:
        p = p * pl.reciprocal(denom, approx=True)
    else:
        p = p / denom
    ctx = jnp.einsum('hqk,hkd->hqd',
                     p.astype(jnp.bfloat16), v3.astype(jnp.bfloat16),
                     preferred_element_type=jnp.float32)              # (nh, M, dv)
    attn = jnp.transpose(ctx, (1, 0, 2)).reshape(M, dvt)              # (M, nh*dv)

    attn_out = jnp.dot(attn.astype(jnp.bfloat16), wo_ref[0],
                       preferred_element_type=jnp.float32) + bo

    # residual + LayerNorm 1 (f32 statistics)
    y = x + attn_out
    mu = jnp.mean(y, axis=-1, keepdims=True)
    var = jnp.mean((y - mu) ** 2, axis=-1, keepdims=True)
    y = (y - mu) * jax.lax.rsqrt(var + eps) * ln1g + ln1b

    # ---- feed-forward (bf16 MXU, f32 acc) ----
    h1 = jnp.dot(y.astype(jnp.bfloat16), w1_ref[0],
                 preferred_element_type=jnp.float32) + b1_ref[0]
    h1 = jnp.maximum(h1, 0.0)
    h2 = jnp.dot(h1.astype(jnp.bfloat16), w2_ref[0],
                 preferred_element_type=jnp.float32) + b2

    # residual + LayerNorm 2
    z = y + h2
    mu2 = jnp.mean(z, axis=-1, keepdims=True)
    var2 = jnp.mean((z - mu2) ** 2, axis=-1, keepdims=True)
    z = (z - mu2) * jax.lax.rsqrt(var2 + eps) * ln2g + ln2b

    act_ref[...] = z                           # carry to next layer

    @pl.when(layer == num_layers - 1)
    def _():
        out_ref[...] = z.reshape(TB, S, H).astype(out_ref.dtype)


def transformer_encoder(x, key_padding_mask, stacked_params, *,
                        num_heads, key_size, value_size,
                        batch_tile=None, approx_recip=True):
    B, S, H = x.shape
    L = stacked_params["wqkv"].shape[0]
    FF = stacked_params["w1"].shape[-1]
    Wtot = num_heads * (2 * key_size + value_size)
    dvt = num_heads * value_size

    # ---- batch tile: aim for >=256 matmul rows (MXU M fill), bounded by B.
    if batch_tile is None:
        batch_tile = max(1, pl.cdiv(256, S))
    TB = max(1, min(batch_tile, B))
    pad_b = (-B) % TB
    Bp = B + pad_b
    NB = Bp // TB
    M = TB * S

    if pad_b:
        x = jnp.pad(x, ((0, pad_b), (0, 0), (0, 0)))
        key_padding_mask = jnp.pad(key_padding_mask, ((0, pad_b), (0, 0)))

    # ---- additive attention mask, precomputed once on the host:
    # block-diagonal over the fused batch tile (a query of batch element i may
    # only attend to keys of batch element i) + key padding (-1e9 = ignore).
    pad_add = jnp.where(key_padding_mask, -1e9, 0.0).astype(jnp.float32)  # (Bp, S)
    pad_add = pad_add.reshape(NB, 1, M)
    bid = jnp.repeat(jnp.arange(TB, dtype=jnp.int32), S)                  # (M,)
    block_diag = jnp.where(bid[:, None] == bid[None, :], 0.0, -1e9)
    mask_add = (block_diag[None] + pad_add).astype(jnp.float32)           # (NB, M, M)

    names = ("wqkv", "bqkv", "wo", "w1", "b1", "w2", "vecs")
    weights = [stacked_params[n] for n in names]

    def w_spec(w):
        # All stacked weights are 3-D with a leading layer dim.
        return pl.BlockSpec((1,) + w.shape[1:], lambda b, l: (l, 0, 0))

    in_specs = [
        pl.BlockSpec((TB, S, H), lambda b, l: (b, 0, 0)),   # activations
        pl.BlockSpec((1, M, M), lambda b, l: (b, 0, 0)),    # additive mask
    ] + [w_spec(w) for w in weights]

    kernel = functools.partial(
        _encoder_stack_kernel,
        num_heads=num_heads, key_size=key_size, value_size=value_size,
        approx_recip=approx_recip)

    # Cost hint so XLA can schedule surrounding ops around the call
    # (weights are fetched once per batch tile, not once per batch element).
    flops_per_step = (
        2 * M * H * Wtot                                       # fused QKV proj
        + 2 * num_heads * M * M * (key_size + value_size)      # scores + ctx
        + 2 * M * dvt * H                                      # output proj
        + 4 * M * H * FF)                                      # FFN
    weight_bytes = sum(int(w.size) * w.dtype.itemsize for w in weights)
    bytes_accessed = int(
        2 * Bp * S * H * x.dtype.itemsize      # activations in + out
        + weight_bytes * NB                    # weights, once per batch tile
        + mask_add.size * 4)
    cost = pl.CostEstimate(
        flops=int(flops_per_step * NB * L),
        transcendentals=int(num_heads * M * M * NB * L),
        bytes_accessed=bytes_accessed)

    # VMEM budget: generation-aware (64 MiB/TC on v7x vs 128 MiB on v5e/v6e).
    try:
        vmem_cap = pltpu.get_tpu_info().vmem_capacity_bytes
        vmem_limit = int(min(100 * 1024 * 1024, (vmem_cap * 3) // 4))
    except Exception:  # pragma: no cover - conservative fallback
        vmem_limit = 64 * 1024 * 1024

    out = pl.pallas_call(
        kernel,
        out_shape=jax.ShapeDtypeStruct((Bp, S, H), x.dtype),
        grid_spec=pltpu.PrefetchScalarGridSpec(
            num_scalar_prefetch=0,
            grid=(NB, L),                       # layer axis last ("arbitrary")
            in_specs=in_specs,
            out_specs=pl.BlockSpec((TB, S, H), lambda b, l: (b, 0, 0)),
            scratch_shapes=[pltpu.VMEM((M, H), jnp.float32)],
        ),
        compiler_params=pltpu.CompilerParams(
            dimension_semantics=("parallel", "arbitrary"),
            vmem_limit_bytes=vmem_limit),
        cost_estimate=cost,
    )(x, mask_add, *weights)

    return out[:B] if pad_b else out


def init_stacked_params(key, num_layers, hidden_size, num_heads, key_size,
                        value_size, feedforward_size):
    """Per-layer params stacked on a leading L dim; matmul weights in bf16.

    Kernel-friendly layouts:
      wqkv : (L, H, nh*(2*dk+dv))  columns head-major [h0:(q|k|v), h1:(...), ...]
      wo   : (L, nh*dv, H)         rows head-major
      vecs : (L, 6, H)             rows = [bo, ln1_g, ln1_b, b2, ln2_g, ln2_b]
    """
    H, FF, L = hidden_size, feedforward_size, num_layers
    nh, dk, dv = num_heads, key_size, value_size
    Wtot = nh * (2 * dk + dv)
    ks = jax.random.split(key, 4)
    s = 0.02

    def nrm(k, shape):
        return (s * jax.random.normal(k, shape, jnp.float32)).astype(jnp.bfloat16)

    vecs = jnp.zeros((L, 6, H), jnp.float32)
    vecs = vecs.at[:, 1, :].set(1.0)   # LayerNorm-1 gamma
    vecs = vecs.at[:, 4, :].set(1.0)   # LayerNorm-2 gamma

    return {
        "wqkv": nrm(ks[0], (L, H, Wtot)),
        "bqkv": jnp.zeros((L, 1, Wtot), jnp.float32),
        "wo": nrm(ks[1], (L, nh * dv, H)),
        "w1": nrm(ks[2], (L, H, FF)),
        "b1": jnp.zeros((L, 1, FF), jnp.float32),
        "w2": nrm(ks[3], (L, FF, H)),
        "vecs": vecs,
    }


if __name__ == "__main__":
    # small, kernel-friendly shapes consistent with the module
    stack_size = 2
    num_heads = 4
    hidden_size = 32
    key_size = 8
    value_size = 8
    feedforward_size = 64
    batch = 2
    seq = 8

    root = jax.random.PRNGKey(0)
    k_x, k_params = jax.random.split(root)

    x = jax.random.normal(k_x, (batch, seq, hidden_size), jnp.float32)
    # last two key positions of batch element 1 are padding
    key_padding_mask = jnp.zeros((batch, seq), dtype=bool)
    key_padding_mask = key_padding_mask.at[1, -2:].set(True)

    params = init_stacked_params(k_params, stack_size, hidden_size, num_heads,
                                 key_size, value_size, feedforward_size)

    out = transformer_encoder(x, key_padding_mask, params,
                              num_heads=num_heads, key_size=key_size,
                              value_size=value_size)
    jax.block_until_ready(out)
    assert out.shape == (batch, seq, hidden_size)
    assert bool(jnp.all(jnp.isfinite(out)))
    print("KERNEL_OK")
</pallas_src>

<mosaic_0001>
module attributes {stable_mosaic.version = 11 : i64} {
  func.func @_encoder_stack_kernel(%arg0: i32, %arg1: i32, %arg2: memref<2x8x32xf32, #tpu.memory_space<vmem>>, %arg3: memref<1x16x16xf32, #tpu.memory_space<vmem>>, %arg4: memref<1x32x96xbf16, #tpu.memory_space<vmem>>, %arg5: memref<1x1x96xf32, #tpu.memory_space<vmem>>, %arg6: memref<1x32x32xbf16, #tpu.memory_space<vmem>>, %arg7: memref<1x32x64xbf16, #tpu.memory_space<vmem>>, %arg8: memref<1x1x64xf32, #tpu.memory_space<vmem>>, %arg9: memref<1x64x32xbf16, #tpu.memory_space<vmem>>, %arg10: memref<1x6x32xf32, #tpu.memory_space<vmem>>, %arg11: memref<2x8x32xf32, #tpu.memory_space<vmem>>, %arg12: memref<16x32xf32, #tpu.memory_space<vmem>>) attributes {dimension_semantics = [#tpu.dimension_semantics<parallel>, #tpu.dimension_semantics<arbitrary>], iteration_bounds = array<i64: 1, 2>, scalar_prefetch = 0 : i64, scratch_operands = 1 : i64, tpu.core_type = #tpu.core_type<tc>, window_params = [{transform_indices = @transform_0, window_bounds = array<i64: 2, 8, 32>}, {transform_indices = @transform_1, window_bounds = array<i64: 1, 16, 16>}, {transform_indices = @transform_2, window_bounds = array<i64: 1, 32, 96>}, {transform_indices = @transform_3, window_bounds = array<i64: 1, 1, 96>}, {transform_indices = @transform_4, window_bounds = array<i64: 1, 32, 32>}, {transform_indices = @transform_5, window_bounds = array<i64: 1, 32, 64>}, {transform_indices = @transform_6, window_bounds = array<i64: 1, 1, 64>}, {transform_indices = @transform_7, window_bounds = array<i64: 1, 64, 32>}, {transform_indices = @transform_8, window_bounds = array<i64: 1, 6, 32>}, {transform_indices = @transform_9, window_bounds = array<i64: 2, 8, 32>}]} {
    %c0_i32 = arith.constant 0 : i32
    %0 = arith.cmpi eq, %arg1, %c0_i32 : i32
    %1 = arith.extui %0 : i1 to i32
    %c0_i32_0 = arith.constant 0 : i32
    %2 = arith.cmpi ne, %1, %c0_i32_0 : i32
    scf.if %2 {
      %c0_48 = arith.constant 0 : index
      %c0_49 = arith.constant 0 : index
      %c0_50 = arith.constant 0 : index
      %122 = vector.load %arg2[%c0_48, %c0_49, %c0_50] : memref<2x8x32xf32, #tpu.memory_space<vmem>>, vector<2x8x32xf32>
      %123 = vector.shape_cast %122 : vector<2x8x32xf32> to vector<16x32xf32>
      %c0_51 = arith.constant 0 : index
      %c0_52 = arith.constant 0 : index
      %124 = vector.load %arg12[%c0_51, %c0_52] : memref<16x32xf32, #tpu.memory_space<vmem>>, vector<16x32xf32>
      tpu.vector_store %arg12[%c0_51, %c0_52], %123 {strides = array<i32>} : memref<16x32xf32, #tpu.memory_space<vmem>>, vector<16x32xf32>,
    } else {
    }
    %c0 = arith.constant 0 : index
    %c0_1 = arith.constant 0 : index
    %3 = vector.load %arg12[%c0, %c0_1] : memref<16x32xf32, #tpu.memory_space<vmem>>, vector<16x32xf32>
    %4 = arith.truncf %3 : vector<16x32xf32> to vector<16x32xbf16>
    %c0_2 = arith.constant 0 : index
    %c0_3 = arith.constant 0 : index
    %c0_4 = arith.constant 0 : index
    %5 = vector.load %arg3[%c0_2, %c0_3, %c0_4] : memref<1x16x16xf32, #tpu.memory_space<vmem>>, vector<1x16x16xf32>
    %6 = vector.shape_cast %5 : vector<1x16x16xf32> to vector<16x16xf32>
    %c0_5 = arith.constant 0 : index
    %c0_6 = arith.constant 0 : index
    %c0_7 = arith.constant 0 : index
    %7 = vector.load %arg10[%c0_5, %c0_6, %c0_7] : memref<1x6x32xf32, #tpu.memory_space<vmem>>, vector<1x6x32xf32>
    %8 = vector.shape_cast %7 : vector<1x6x32xf32> to vector<6x32xf32>
    %9 = vector.extract_strided_slice %8 {offsets = [0, 0], sizes = [1, 32], strides = [1, 1]} : vector<6x32xf32> to vector<1x32xf32>
    %10 = vector.extract_strided_slice %8 {offsets = [1, 0], sizes = [1, 32], strides = [1, 1]} : vector<6x32xf32> to vector<1x32xf32>
    %11 = vector.extract_strided_slice %8 {offsets = [2, 0], sizes = [1, 32], strides = [1, 1]} : vector<6x32xf32> to vector<1x32xf32>
    %12 = vector.extract_strided_slice %8 {offsets = [3, 0], sizes = [1, 32], strides = [1, 1]} : vector<6x32xf32> to vector<1x32xf32>
    %13 = vector.extract_strided_slice %8 {offsets = [4, 0], sizes = [1, 32], strides = [1, 1]} : vector<6x32xf32> to vector<1x32xf32>
    %14 = vector.extract_strided_slice %8 {offsets = [5, 0], sizes = [1, 32], strides = [1, 1]} : vector<6x32xf32> to vector<1x32xf32>
    %c0_8 = arith.constant 0 : index
    %c0_9 = arith.constant 0 : index
    %c0_10 = arith.constant 0 : index
    %15 = vector.load %arg4[%c0_8, %c0_9, %c0_10] : memref<1x32x96xbf16, #tpu.memory_space<vmem>>, vector<1x32x96xbf16>
    %16 = vector.shape_cast %15 : vector<1x32x96xbf16> to vector<32x96xbf16>
    %cst = arith.constant dense<0.000000e+00> : vector<16x96xf32>
    %17 = tpu.matmul %4, %16, %cst {dimension_numbers = #tpu.dot_dimension_numbers<[1], [0], [0], [1], [0, 0, 1, 1], [], []>} : vector<16x32xbf16>, vector<32x96xbf16>, vector<16x96xf32> -> vector<16x96xf32>
    %c0_11 = arith.constant 0 : index
    %c0_12 = arith.constant 0 : index
    %c0_13 = arith.constant 0 : index
    %18 = vector.load %arg5[%c0_11, %c0_12, %c0_13] : memref<1x1x96xf32, #tpu.memory_space<vmem>>, vector<1x1x96xf32>
    %19 = vector.shape_cast %18 : vector<1x1x96xf32> to vector<1x96xf32>
    %20 = vector.broadcast %19 : vector<1x96xf32> to vector<16x96xf32>
    %21 = arith.addf %17, %20 : vector<16x96xf32>
    %22 = vector.shape_cast %21 : vector<16x96xf32> to vector<16x4x24xf32>
    %23 = tpu.transpose %22, [1, 0, 2] : vector<16x4x24xf32> -> vector<4x16x24xf32>
    %24 = vector.extract_strided_slice %23 {offsets = [0, 0, 0], sizes = [4, 16, 8], strides = [1, 1, 1]} : vector<4x16x24xf32> to vector<4x16x8xf32>
    %cst_14 = arith.constant 0.353553385 : f32
    %25 = vector.broadcast %cst_14 : f32 to vector<4x16x8xf32>
    %26 = arith.mulf %24, %25 : vector<4x16x8xf32>
    %27 = vector.extract_strided_slice %23 {offsets = [0, 0, 8], sizes = [4, 16, 8], strides = [1, 1, 1]} : vector<4x16x24xf32> to vector<4x16x8xf32>
    %28 = vector.extract_strided_slice %23 {offsets = [0, 0, 16], sizes = [4, 16, 8], strides = [1, 1, 1]} : vector<4x16x24xf32> to vector<4x16x8xf32>
    %29 = arith.truncf %26 : vector<4x16x8xf32> to vector<4x16x8xbf16>
    %30 = arith.truncf %27 : vector<4x16x8xf32> to vector<4x16x8xbf16>
    "tpu.trace_start"() <{level = 10 : i32, message = "hqd,hkd->hqk"}> : () -> ()
    %cst_15 = arith.constant dense<0.000000e+00> : vector<4x16x16xf32>
    %31 = tpu.matmul %29, %30, %cst_15 {dimension_numbers = #tpu.dot_dimension_numbers<[2], [2], [1], [1], [0, 0, 0, 1, 1, 1], [0], [0]>} : vector<4x16x8xbf16>, vector<4x16x8xbf16>, vector<4x16x16xf32> -> vector<4x16x16xf32>
    "tpu.trace_stop"() : () -> ()
    %32 = vector.shape_cast %6 : vector<16x16xf32> to vector<1x16x16xf32>
    %33 = vector.broadcast %32 : vector<1x16x16xf32> to vector<4x16x16xf32>
    %34 = arith.addf %31, %33 : vector<4x16x16xf32>
    %cst_16 = arith.constant dense<0xFF800000> : vector<4x16xf32>
    %35 = vector.multi_reduction <maximumf>, %34, %cst_16 [2] : vector<4x16x16xf32> to vector<4x16xf32>
    %36 = vector.shape_cast %35 : vector<4x16xf32> to vector<4x16x1xf32>
    %37 = vector.broadcast %36 : vector<4x16x1xf32> to vector<4x16x16xf32>
    %38 = arith.subf %34, %37 : vector<4x16x16xf32>
    %39 = math.exp %38 : vector<4x16x16xf32>
    %cst_17 = arith.constant dense<0.000000e+00> : vector<4x16xf32>
    %40 = vector.multi_reduction <add>, %39, %cst_17 [2] : vector<4x16x16xf32> to vector<4x16xf32>
    %41 = vector.shape_cast %40 : vector<4x16xf32> to vector<4x16x1xf32>
    %42 = tpu.reciprocal %41 {approx = true} : vector<4x16x1xf32> -> vector<4x16x1xf32>
    %43 = vector.broadcast %42 : vector<4x16x1xf32> to vector<4x16x16xf32>
    %44 = arith.mulf %39, %43 : vector<4x16x16xf32>
    %45 = arith.truncf %44 : vector<4x16x16xf32> to vector<4x16x16xbf16>
    %46 = arith.truncf %28 : vector<4x16x8xf32> to vector<4x16x8xbf16>
    "tpu.trace_start"() <{level = 10 : i32, message = "hqk,hkd->hqd"}> : () -> ()
    %cst_18 = arith.constant dense<0.000000e+00> : vector<4x16x8xf32>
    %47 = tpu.matmul %45, %46, %cst_18 {dimension_numbers = #tpu.dot_dimension_numbers<[2], [1], [1], [2], [0, 0, 0, 1, 1, 2], [0], [0]>} : vector<4x16x16xbf16>, vector<4x16x8xbf16>, vector<4x16x8xf32> -> vector<4x16x8xf32>
    "tpu.trace_stop"() : () -> ()
    %48 = tpu.transpose %47, [1, 0, 2] : vector<4x16x8xf32> -> vector<16x4x8xf32>
    %49 = vector.shape_cast %48 : vector<16x4x8xf32> to vector<16x32xf32>
    %50 = arith.truncf %49 : vector<16x32xf32> to vector<16x32xbf16>
    %c0_19 = arith.constant 0 : index
    %c0_20 = arith.constant 0 : index
    %c0_21 = arith.constant 0 : index
    %51 = vector.load %arg6[%c0_19, %c0_20, %c0_21] : memref<1x32x32xbf16, #tpu.memory_space<vmem>>, vector<1x32x32xbf16>
    %52 = vector.shape_cast %51 : vector<1x32x32xbf16> to vector<32x32xbf16>
    %cst_22 = arith.constant dense<0.000000e+00> : vector<16x32xf32>
    %53 = tpu.matmul %50, %52, %cst_22 {dimension_numbers = #tpu.dot_dimension_numbers<[1], [0], [0], [1], [0, 0, 1, 1], [], []>} : vector<16x32xbf16>, vector<32x32xbf16>, vector<16x32xf32> -> vector<16x32xf32>
    %54 = vector.broadcast %9 : vector<1x32xf32> to vector<16x32xf32>
    %55 = arith.addf %53, %54 : vector<16x32xf32>
    %56 = arith.addf %3, %55 : vector<16x32xf32>
    %cst_23 = arith.constant dense<0.000000e+00> : vector<16xf32>
    %57 = vector.multi_reduction <add>, %56, %cst_23 [1] : vector<16x32xf32> to vector<16xf32>
    %58 = vector.shape_cast %57 : vector<16xf32> to vector<16x1xf32>
    %cst_24 = arith.constant 3.200000e+01 : f32
    %59 = vector.broadcast %cst_24 : f32 to vector<16x1xf32>
    %60 = arith.divf %58, %59 : vector<16x1xf32>
    %61 = vector.broadcast %60 : vector<16x1xf32> to vector<16x32xf32>
    %62 = arith.subf %56, %61 : vector<16x32xf32>
    %63 = arith.mulf %62, %62 : vector<16x32xf32>
    %cst_25 = arith.constant dense<0.000000e+00> : vector<16xf32>
    %64 = vector.multi_reduction <add>, %63, %cst_25 [1] : vector<16x32xf32> to vector<16xf32>
    %65 = vector.shape_cast %64 : vector<16xf32> to vector<16x1xf32>
    %cst_26 = arith.constant 3.200000e+01 : f32
    %66 = vector.broadcast %cst_26 : f32 to vector<16x1xf32>
    %67 = arith.divf %65, %66 : vector<16x1xf32>
    %68 = vector.broadcast %60 : vector<16x1xf32> to vector<16x32xf32>
    %69 = arith.subf %56, %68 : vector<16x32xf32>
    %cst_27 = arith.constant 9.99999974E-6 : f32
    %70 = vector.broadcast %cst_27 : f32 to vector<16x1xf32>
    %71 = arith.addf %67, %70 : vector<16x1xf32>
    %72 = math.rsqrt %71 : vector<16x1xf32>
    %73 = vector.broadcast %72 : vector<16x1xf32> to vector<16x32xf32>
    %74 = arith.mulf %69, %73 : vector<16x32xf32>
    %75 = vector.broadcast %10 : vector<1x32xf32> to vector<16x32xf32>
    %76 = arith.mulf %74, %75 : vector<16x32xf32>
    %77 = vector.broadcast %11 : vector<1x32xf32> to vector<16x32xf32>
    %78 = arith.addf %76, %77 : vector<16x32xf32>
    %79 = arith.truncf %78 : vector<16x32xf32> to vector<16x32xbf16>
    %c0_28 = arith.constant 0 : index
    %c0_29 = arith.constant 0 : index
    %c0_30 = arith.constant 0 : index
    %80 = vector.load %arg7[%c0_28, %c0_29, %c0_30] : memref<1x32x64xbf16, #tpu.memory_space<vmem>>, vector<1x32x64xbf16>
    %81 = vector.shape_cast %80 : vector<1x32x64xbf16> to vector<32x64xbf16>
    %cst_31 = arith.constant dense<0.000000e+00> : vector<16x64xf32>
    %82 = tpu.matmul %79, %81, %cst_31 {dimension_numbers = #tpu.dot_dimension_numbers<[1], [0], [0], [1], [0, 0, 1, 1], [], []>} : vector<16x32xbf16>, vector<32x64xbf16>, vector<16x64xf32> -> vector<16x64xf32>
    %c0_32 = arith.constant 0 : index
    %c0_33 = arith.constant 0 : index
    %c0_34 = arith.constant 0 : index
    %83 = vector.load %arg8[%c0_32, %c0_33, %c0_34] : memref<1x1x64xf32, #tpu.memory_space<vmem>>, vector<1x1x64xf32>
    %84 = vector.shape_cast %83 : vector<1x1x64xf32> to vector<1x64xf32>
    %85 = vector.broadcast %84 : vector<1x64xf32> to vector<16x64xf32>
    %86 = arith.addf %82, %85 : vector<16x64xf32>
    %cst_35 = arith.constant 0.000000e+00 : f32
    %87 = vector.broadcast %cst_35 : f32 to vector<16x64xf32>
    %88 = arith.maximumf %86, %87 : vector<16x64xf32>
    %89 = arith.truncf %88 : vector<16x64xf32> to vector<16x64xbf16>
    %c0_36 = arith.constant 0 : index
    %c0_37 = arith.constant 0 : index
    %c0_38 = arith.constant 0 : index
    %90 = vector.load %arg9[%c0_36, %c0_37, %c0_38] : memref<1x64x32xbf16, #tpu.memory_space<vmem>>, vector<1x64x32xbf16>
    %91 = vector.shape_cast %90 : vector<1x64x32xbf16> to vector<64x32xbf16>
    %cst_39 = arith.constant dense<0.000000e+00> : vector<16x32xf32>
    %92 = tpu.matmul %89, %91, %cst_39 {dimension_numbers = #tpu.dot_dimension_numbers<[1], [0], [0], [1], [0, 0, 1, 1], [], []>} : vector<16x64xbf16>, vector<64x32xbf16>, vector<16x32xf32> -> vector<16x32xf32>
    %93 = vector.broadcast %12 : vector<1x32xf32> to vector<16x32xf32>
    %94 = arith.addf %92, %93 : vector<16x32xf32>
    %95 = arith.addf %78, %94 : vector<16x32xf32>
    %cst_40 = arith.constant dense<0.000000e+00> : vector<16xf32>
    %96 = vector.multi_reduction <add>, %95, %cst_40 [1] : vector<16x32xf32> to vector<16xf32>
    %97 = vector.shape_cast %96 : vector<16xf32> to vector<16x1xf32>
    %cst_41 = arith.constant 3.200000e+01 : f32
    %98 = vector.broadcast %cst_41 : f32 to vector<16x1xf32>
    %99 = arith.divf %97, %98 : vector<16x1xf32>
    %100 = vector.broadcast %99 : vector<16x1xf32> to vector<16x32xf32>
    %101 = arith.subf %95, %100 : vector<16x32xf32>
    %102 = arith.mulf %101, %101 : vector<16x32xf32>
    %cst_42 = arith.constant dense<0.000000e+00> : vector<16xf32>
    %103 = vector.multi_reduction <add>, %102, %cst_42 [1] : vector<16x32xf32> to vector<16xf32>
    %104 = vector.shape_cast %103 : vector<16xf32> to vector<16x1xf32>
    %cst_43 = arith.constant 3.200000e+01 : f32
    %105 = vector.broadcast %cst_43 : f32 to vector<16x1xf32>
    %106 = arith.divf %104, %105 : vector<16x1xf32>
    %107 = vector.broadcast %99 : vector<16x1xf32> to vector<16x32xf32>
    %108 = arith.subf %95, %107 : vector<16x32xf32>
    %cst_44 = arith.constant 9.99999974E-6 : f32
    %109 = vector.broadcast %cst_44 : f32 to vector<16x1xf32>
    %110 = arith.addf %106, %109 : vector<16x1xf32>
    %111 = math.rsqrt %110 : vector<16x1xf32>
    %112 = vector.broadcast %111 : vector<16x1xf32> to vector<16x32xf32>
    %113 = arith.mulf %108, %112 : vector<16x32xf32>
    %114 = vector.broadcast %13 : vector<1x32xf32> to vector<16x32xf32>
    %115 = arith.mulf %113, %114 : vector<16x32xf32>
    %116 = vector.broadcast %14 : vector<1x32xf32> to vector<16x32xf32>
    %117 = arith.addf %115, %116 : vector<16x32xf32>
    %c0_45 = arith.constant 0 : index
    %c0_46 = arith.constant 0 : index
    %118 = vector.load %arg12[%c0_45, %c0_46] : memref<16x32xf32, #tpu.memory_space<vmem>>, vector<16x32xf32>
    tpu.vector_store %arg12[%c0_45, %c0_46], %117 {strides = array<i32>} : memref<16x32xf32, #tpu.memory_space<vmem>>, vector<16x32xf32>,
    %c1_i32 = arith.constant 1 : i32
    %119 = arith.cmpi eq, %arg1, %c1_i32 : i32
    %120 = arith.extui %119 : i1 to i32
    %c0_i32_47 = arith.constant 0 : i32
    %121 = arith.cmpi ne, %120, %c0_i32_47 : i32
    scf.if %121 {
      %122 = vector.shape_cast %117 : vector<16x32xf32> to vector<2x8x32xf32>
      %c0_48 = arith.constant 0 : index
      %c0_49 = arith.constant 0 : index
      %c0_50 = arith.constant 0 : index
      %123 = vector.load %arg11[%c0_48, %c0_49, %c0_50] : memref<2x8x32xf32, #tpu.memory_space<vmem>>, vector<2x8x32xf32>
      tpu.vector_store %arg11[%c0_48, %c0_49, %c0_50], %122 {strides = array<i32>} : memref<2x8x32xf32, #tpu.memory_space<vmem>>, vector<2x8x32xf32>,
    } else {
    }
    return
  }
  func.func @transform_0(%arg0: i32, %arg1: i32) -> (i32, i32, i32) {
    %c0_i32 = arith.constant 0 : i32
    %c0_i32_0 = arith.constant 0 : i32
    %c0_i32_1 = arith.constant 0 : i32
    return %arg0, %c0_i32, %c0_i32_0 : i32, i32, i32
  }
  func.func @transform_1(%arg0: i32, %arg1: i32) -> (i32, i32, i32) {
    %c0_i32 = arith.constant 0 : i32
    %c0_i32_0 = arith.constant 0 : i32
    %c0_i32_1 = arith.constant 0 : i32
    return %arg0, %c0_i32, %c0_i32_0 : i32, i32, i32
  }
  func.func @transform_2(%arg0: i32, %arg1: i32) -> (i32, i32, i32) {
    %c0_i32 = arith.constant 0 : i32
    %c0_i32_0 = arith.constant 0 : i32
    %c0_i32_1 = arith.constant 0 : i32
    return %arg1, %c0_i32, %c0_i32_0 : i32, i32, i32
  }
  func.func @transform_3(%arg0: i32, %arg1: i32) -> (i32, i32, i32) {
    %c0_i32 = arith.constant 0 : i32
    %c0_i32_0 = arith.constant 0 : i32
    %c0_i32_1 = arith.constant 0 : i32
    return %arg1, %c0_i32, %c0_i32_0 : i32, i32, i32
  }
  func.func @transform_4(%arg0: i32, %arg1: i32) -> (i32, i32, i32) {
    %c0_i32 = arith.constant 0 : i32
    %c0_i32_0 = arith.constant 0 : i32
    %c0_i32_1 = arith.constant 0 : i32
    return %arg1, %c0_i32, %c0_i32_0 : i32, i32, i32
  }
  func.func @transform_5(%arg0: i32, %arg1: i32) -> (i32, i32, i32) {
    %c0_i32 = arith.constant 0 : i32
    %c0_i32_0 = arith.constant 0 : i32
    %c0_i32_1 = arith.constant 0 : i32
    return %arg1, %c0_i32, %c0_i32_0 : i32, i32, i32
  }
  func.func @transform_6(%arg0: i32, %arg1: i32) -> (i32, i32, i32) {
    %c0_i32 = arith.constant 0 : i32
    %c0_i32_0 = arith.constant 0 : i32
    %c0_i32_1 = arith.constant 0 : i32
    return %arg1, %c0_i32, %c0_i32_0 : i32, i32, i32
  }
  func.func @transform_7(%arg0: i32, %arg1: i32) -> (i32, i32, i32) {
    %c0_i32 = arith.constant 0 : i32
    %c0_i32_0 = arith.constant 0 : i32
    %c0_i32_1 = arith.constant 0 : i32
    return %arg1, %c0_i32, %c0_i32_0 : i32, i32, i32
  }
  func.func @transform_8(%arg0: i32, %arg1: i32) -> (i32, i32, i32) {
    %c0_i32 = arith.constant 0 : i32
    %c0_i32_0 = arith.constant 0 : i32
    %c0_i32_1 = arith.constant 0 : i32
    return %arg1, %c0_i32, %c0_i32_0 : i32, i32, i32
  }
  func.func @transform_9(%arg0: i32, %arg1: i32) -> (i32, i32, i32) {
    %c0_i32 = arith.constant 0 : i32
    %c0_i32_0 = arith.constant 0 : i32
    %c0_i32_1 = arith.constant 0 : i32
    return %arg0, %c0_i32, %c0_i32_0 : i32, i32, i32
  }
}

</mosaic_0001>

<llo_original>
// kernel: tpu_custom_call.1
$region0: #{tpu_custom_call.1}
  #allocation0 [shape = 'u32[]', space=smem, size = 0x4, offset = 0x4, fixed_abs, tag = 'smem constant byte address 0x4 - core index']
  #allocation1 [shape = 'u32[72,128]{1,0:T(1,128)}', space=vmem, size = 0x9000, scoped, tag = 'internal scratch']
  #allocation2 [shape = 'f32[16,32]{1,0:T(8,128)}', space=vmem, size = 0x2000, scoped, tag = 'scratch operand']
  %s0 = inlined_call_operand.hbm [shape: f32[2,8,32], index: 0, kind: input, shape index: {}]
  %s1 = inlined_call_operand.hbm [shape: f32[1,16,16], index: 1, kind: input, shape index: {}]
  %s2 = inlined_call_operand.vmem [shape: bf16[2,32,96], index: 2, kind: input, shape index: {}]
  %s3 = inlined_call_operand.vmem [shape: f32[2,1,96], index: 3, kind: input, shape index: {}]
  %s4 = inlined_call_operand.vmem [shape: bf16[2,32,32], index: 4, kind: input, shape index: {}]
  %s5 = inlined_call_operand.vmem [shape: bf16[2,32,64], index: 5, kind: input, shape index: {}]
  %s6 = inlined_call_operand.hbm [shape: f32[2,1,64], index: 6, kind: input, shape index: {}]
  %s7 = inlined_call_operand.vmem [shape: bf16[2,64,32], index: 7, kind: input, shape index: {}]
  %s8 = inlined_call_operand.vmem [shape: f32[2,6,32], index: 8, kind: input, shape index: {}]
  %s9 = inlined_call_operand.hbm [shape: f32[2,8,32], index: 9, kind: output, shape index: {}]
  %s10 = sld [smem:[#allocation0]]
  $region89: #{tpu_custom_call.1} parent=0
    _
  %s12 = ssub.s32 1, %s10
  %s13 = scalar_select 0, %s12, %s10
  $region1: #{tpu_custom_call.1} parent=0
    #allocation3 [shape = 'u8[8192]{0}', space=vmem, size = 0x2000, scoped, tag = 'input window, operand 0, single buffered']
    #allocation4 [shape = 's32[2]{0}', space=sflag, size = 0x8, scoped, tag = 'scoped memory for tpu_custom_call.1']
    #allocation5 [shape = 's32[2]{0}', space=sflag, size = 0x8, scoped, tag = 'scoped memory for tpu_custom_call.1']
    #allocation6 [shape = 'u8[8192]{0}', space=vmem, size = 0x2000, scoped, tag = 'input window, operand 1, single buffered']
    #allocation7 [shape = 's32[1]{0}', space=sflag, size = 0x4, scoped, tag = 'scoped memory for tpu_custom_call.1']
    #allocation8 [shape = 'u8[1024]{0}', space=vmem, size = 0x400, scoped, tag = 'input window, operand 6']
    #allocation9 [shape = 'u8[8192]{0}', space=vmem, size = 0x2000, scoped, tag = 'output window, operand 0, single buffered']
    %14 = vsyncpa [#allocation4], 0
    %15 = vsyncpa [#allocation7], 0
    %16 = vsyncpa [#allocation5], 0
    loop: start=0, step=1, limit=4
    $region2: #{tpu_custom_call.1} parent=1 // loop_pre_header
      _
    $region3: #{tpu_custom_call.1} parent=1 // loop_header
      %s18 = sphi 0, %s22
      %p19 = scmp.ge.s32.totalorder %s18, 4
      %s25 = sphi 0, %s37
      %s26 = sphi 0, %s33
      %s27 = sphi 0, %s25
      %s28 = sphi 0, %s26
      %s29 = sphi 0, %s27
      %s30 = sphi 0, %s28
      %s40 = sphi 0, %s42
      %s43 = sphi 0, %s40
      %s44 = sphi 0, %s43
      %s60 = sphi 0, %s44
      %s66 = sphi 0, %s68
      %s69 = sphi 0, %s66
      %s70 = sphi 0, %s69
      %s86 = sphi 0, %s70
      %s92 = sphi 0, %s94
      %s95 = sphi 0, %s92
      %s96 = sphi 0, %s95
      %s112 = sphi 0, %s96
      %s118 = sphi 0, %s120
      %s121 = sphi 0, %s118
      %s122 = sphi 0, %s121
      %s138 = sphi 0, %s122
      %s144 = sphi 0, %s146
      %s147 = sphi 0, %s144
      %s148 = sphi 0, %s147
      %s164 = sphi 0, %s148
      %s170 = sphi 0, %s172
      %s173 = sphi 0, %s170
      %s174 = sphi 0, %s173
      %s190 = sphi 0, %s174
      %s196 = sphi 0, %s198
      %s199 = sphi 0, %s196
      %s200 = sphi 0, %s199
      %s216 = sphi 0, %s200
      %s222 = sphi 0, %s224
      %s225 = sphi 0, %s222
      %s226 = sphi 0, %s225
      %s242 = sphi 0, %s226
      %s248 = sphi 0, %s250
      %s251 = sphi 0, %s248
      %s252 = sphi 0, %s251
      %s268 = sphi 0, %s252
      %s274 = sphi 0, %s276
      %s277 = sphi 0, %s274
      %s278 = sphi 0, %s277
      %s294 = sphi 0, %s278
    $region4: #{tpu_custom_call.1} parent=1 // loop_header_branch
      %21 = sbr.rel (%p19) target = $region8
    $region5: #{tpu_custom_call.1} parent=1 // loop_body
      %s23 = ssub.s32 %s18, 1
      %s24 = ssub.s32 %s18, 2
      %s31 = sadd.s32 1, %s26
      %p32 = scmp.ge.s32.totalorder %s31, 2
      %s33 = scalar_select %p32, 0, %s31
      %s34 = sadd.s32 1, %s25
      %s35 = scalar_select %p32, %s34, %s25
      %p36 = scmp.ge.s32.totalorder %s35, 1
      %s37 = scalar_select %p36, 0, %s35
      %s38 = ssub.s32 %s25, %s37
      %p39 = scmp.eq.s32.totalorder %s38, 0
      %s41 = sadd.s32 %s40, 1
      %s42 = scalar_select %p39, %s40, %s41
      %p45 = pneg %p39
      %p46 = scmp.eq.s32.totalorder %s18, 1
      %p47 = por %p45, %p46
      %p48 = scmp.ne.s32.totalorder %s40, %s43
      %p49 = scmp.eq.s32.totalorder %s18, 0
      %p50 = por %p48, %p49
      %p51 = scmp.ne.s32.totalorder %s40, %s43
      %p52 = scmp.eq.s32.totalorder %s23, 1
      %p53 = por %p51, %p52
      %p54 = scmp.ne.s32.totalorder %s43, %s44
      %p55 = scmp.eq.s32.totalorder %s23, 0
      %p56 = por %p54, %p55
      %p57 = scmp.ne.s32.totalorder %s43, %s44
      %p58 = scmp.eq.s32.totalorder %s24, 1
      %p59 = por %p57, %p58
      %p61 = scmp.ne.s32.totalorder %s44, %s60
      %p62 = scmp.eq.s32.totalorder %s24, 0
      %p63 = por %p61, %p62
      %s64 = ssub.s32 %s25, %s37
      %p65 = scmp.eq.s32.totalorder %s64, 0
      %s67 = sadd.s32 %s66, 1
      %s68 = scalar_select %p65, %s66, %s67
      %p71 = pneg %p65
      %p72 = scmp.eq.s32.totalorder %s18, 1
      %p73 = por %p71, %p72
      %p74 = scmp.ne.s32.totalorder %s66, %s69
      %p75 = scmp.eq.s32.totalorder %s18, 0
      %p76 = por %p74, %p75
      %p77 = scmp.ne.s32.totalorder %s66, %s69
      %p78 = scmp.eq.s32.totalorder %s23, 1
      %p79 = por %p77, %p78
      %p80 = scmp.ne.s32.totalorder %s69, %s70
      %p81 = scmp.eq.s32.totalorder %s23, 0
      %p82 = por %p80, %p81
      %p83 = scmp.ne.s32.totalorder %s69, %s70
      %p84 = scmp.eq.s32.totalorder %s24, 1
      %p85 = por %p83, %p84
      %p87 = scmp.ne.s32.totalorder %s70, %s86
      %p88 = scmp.eq.s32.totalorder %s24, 0
      %p89 = por %p87, %p88
      %s90 = ssub.s32 %s26, %s33
      %p91 = scmp.eq.s32.totalorder %s90, 0
      %s93 = sadd.s32 %s92, 1
      %s94 = scalar_select %p91, %s92, %s93
      %p97 = pneg %p91
      %p98 = scmp.eq.s32.totalorder %s18, 1
      %p99 = por %p97, %p98
      %p100 = scmp.ne.s32.totalorder %s92, %s95
      %p101 = scmp.eq.s32.totalorder %s18, 0
      %p102 = por %p100, %p101
      %p103 = scmp.ne.s32.totalorder %s92, %s95
      %p104 = scmp.eq.s32.totalorder %s23, 1
      %p105 = por %p103, %p104
      %p106 = scmp.ne.s32.totalorder %s95, %s96
      %p107 = scmp.eq.s32.totalorder %s23, 0
      %p108 = por %p106, %p107
      %p109 = scmp.ne.s32.totalorder %s95, %s96
      %p110 = scmp.eq.s32.totalorder %s24, 1
      %p111 = por %p109, %p110
      %p113 = scmp.ne.s32.totalorder %s96, %s112
      %p114 = scmp.eq.s32.totalorder %s24, 0
      %p115 = por %p113, %p114
      %s116 = ssub.s32 %s26, %s33
      %p117 = scmp.eq.s32.totalorder %s116, 0
      %s119 = sadd.s32 %s118, 1
      %s120 = scalar_select %p117, %s118, %s119
      %p123 = pneg %p117
      %p124 = scmp.eq.s32.totalorder %s18, 1
      %p125 = por %p123, %p124
      %p126 = scmp.ne.s32.totalorder %s118, %s121
      %p127 = scmp.eq.s32.totalorder %s18, 0
      %p128 = por %p126, %p127
      %p129 = scmp.ne.s32.totalorder %s118, %s121
      %p130 = scmp.eq.s32.totalorder %s23, 1
      %p131 = por %p129, %p130
      %p132 = scmp.ne.s32.totalorder %s121, %s122
      %p133 = scmp.eq.s32.totalorder %s23, 0
      %p134 = por %p132, %p133
      %p135 = scmp.ne.s32.totalorder %s121, %s122
      %p136 = scmp.eq.s32.totalorder %s24, 1
      %p137 = por %p135, %p136
      %p139 = scmp.ne.s32.totalorder %s122, %s138
      %p140 = scmp.eq.s32.totalorder %s24, 0
      %p141 = por %p139, %p140
      %s142 = ssub.s32 %s26, %s33
      %p143 = scmp.eq.s32.totalorder %s142, 0
      %s145 = sadd.s32 %s144, 1
      %s146 = scalar_select %p143, %s144, %s145
      %p149 = pneg %p143
      %p150 = scmp.eq.s32.totalorder %s18, 1
      %p151 = por %p149, %p150
      %p152 = scmp.ne.s32.totalorder %s144, %s147
      %p153 = scmp.eq.s32.totalorder %s18, 0
      %p154 = por %p152, %p153
      %p155 = scmp.ne.s32.totalorder %s144, %s147
      %p156 = scmp.eq.s32.totalorder %s23, 1
      %p157 = por %p155, %p156
      %p158 = scmp.ne.s32.totalorder %s147, %s148
      %p159 = scmp.eq.s32.totalorder %s23, 0
      %p160 = por %p158, %p159
      %p161 = scmp.ne.s32.totalorder %s147, %s148
      %p162 = scmp.eq.s32.totalorder %s24, 1
      %p163 = por %p161, %p162
      %p165 = scmp.ne.s32.totalorder %s148, %s164
      %p166 = scmp.eq.s32.totalorder %s24, 0
      %p167 = por %p165, %p166
      %s168 = ssub.s32 %s26, %s33
      %p169 = scmp.eq.s32.totalorder %s168, 0
      %s171 = sadd.s32 %s170, 1
      %s172 = scalar_select %p169, %s170, %s171
      %p175 = pneg %p169
      %p176 = scmp.eq.s32.totalorder %s18, 1
      %p177 = por %p175, %p176
      %p178 = scmp.ne.s32.totalorder %s170, %s173
      %p179 = scmp.eq.s32.totalorder %s18, 0
      %p180 = por %p178, %p179
      %p181 = scmp.ne.s32.totalorder %s170, %s173
      %p182 = scmp.eq.s32.totalorder %s23, 1
      %p183 = por %p181, %p182
      %p184 = scmp.ne.s32.totalorder %s173, %s174
      %p185 = scmp.eq.s32.totalorder %s23, 0
      %p186 = por %p184, %p185
      %p187 = scmp.ne.s32.totalorder %s173, %s174
      %p188 = scmp.eq.s32.totalorder %s24, 1
      %p189 = por %p187, %p188
      %p191 = scmp.ne.s32.totalorder %s174, %s190
      %p192 = scmp.eq.s32.totalorder %s24, 0
      %p193 = por %p191, %p192
      %s194 = ssub.s32 %s26, %s33
      %p195 = scmp.eq.s32.totalorder %s194, 0
      %s197 = sadd.s32 %s196, 1
      %s198 = scalar_select %p195, %s196, %s197
      %p201 = pneg %p195
      %p202 = scmp.eq.s32.totalorder %s18, 1
      %p203 = por %p201, %p202
      %p204 = scmp.ne.s32.totalorder %s196, %s199
      %p205 = scmp.eq.s32.totalorder %s18, 0
      %p206 = por %p204, %p205
      %p207 = scmp.ne.s32.totalorder %s196, %s199
      %p208 = scmp.eq.s32.totalorder %s23, 1
      %p209 = por %p207, %p208
      %p210 = scmp.ne.s32.totalorder %s199, %s200
      %p211 = scmp.eq.s32.totalorder %s23, 0
      %p212 = por %p210, %p211
      %p213 = scmp.ne.s32.totalorder %s199, %s200
      %p214 = scmp.eq.s32.totalorder %s24, 1
      %p215 = por %p213, %p214
      %p217 = scmp.ne.s32.totalorder %s200, %s216
      %p218 = scmp.eq.s32.totalorder %s24, 0
      %p219 = por %p217, %p218
      %s220 = ssub.s32 %s26, %s33
      %p221 = scmp.eq.s32.totalorder %s220, 0
      %s223 = sadd.s32 %s222, 1
      %s224 = scalar_select %p221, %s222, %s223
      %p227 = pneg %p221
      %p228 = scmp.eq.s32.totalorder %s18, 1
      %p229 = por %p227, %p228
      %p230 = scmp.ne.s32.totalorder %s222, %s225
      %p231 = scmp.eq.s32.totalorder %s18, 0
      %p232 = por %p230, %p231
      %p233 = scmp.ne.s32.totalorder %s222, %s225
      %p234 = scmp.eq.s32.totalorder %s23, 1
      %p235 = por %p233, %p234
      %p236 = scmp.ne.s32.totalorder %s225, %s226
      %p237 = scmp.eq.s32.totalorder %s23, 0
      %p238 = por %p236, %p237
      %p239 = scmp.ne.s32.totalorder %s225, %s226
      %p240 = scmp.eq.s32.totalorder %s24, 1
      %p241 = por %p239, %p240
      %p243 = scmp.ne.s32.totalorder %s226, %s242
      %p244 = scmp.eq.s32.totalorder %s24, 0
      %p245 = por %p243, %p244
      %s246 = ssub.s32 %s26, %s33
      %p247 = scmp.eq.s32.totalorder %s246, 0
      %s249 = sadd.s32 %s248, 1
      %s250 = scalar_select %p247, %s248, %s249
      %p253 = pneg %p247
      %p254 = scmp.eq.s32.totalorder %s18, 1
      %p255 = por %p253, %p254
      %p256 = scmp.ne.s32.totalorder %s248, %s251
      %p257 = scmp.eq.s32.totalorder %s18, 0
      %p258 = por %p256, %p257
      %p259 = scmp.ne.s32.totalorder %s248, %s251
      %p260 = scmp.eq.s32.totalorder %s23, 1
      %p261 = por %p259, %p260
      %p262 = scmp.ne.s32.totalorder %s251, %s252
      %p263 = scmp.eq.s32.totalorder %s23, 0
      %p264 = por %p262, %p263
      %p265 = scmp.ne.s32.totalorder %s251, %s252
      %p266 = scmp.eq.s32.totalorder %s24, 1
      %p267 = por %p265, %p266
      %p269 = scmp.ne.s32.totalorder %s252, %s268
      %p270 = scmp.eq.s32.totalorder %s24, 0
      %p271 = por %p269, %p270
      %s272 = ssub.s32 %s25, %s37
      %p273 = scmp.eq.s32.totalorder %s272, 0
      %s275 = sadd.s32 %s274, 1
      %s276 = scalar_select %p273, %s274, %s275
      %p279 = pneg %p273
      %p280 = scmp.eq.s32.totalorder %s18, 1
      %p281 = por %p279, %p280
      %p282 = scmp.ne.s32.totalorder %s274, %s277
      %p283 = scmp.eq.s32.totalorder %s18, 0
      %p284 = por %p282, %p283
      %p285 = scmp.ne.s32.totalorder %s274, %s277
      %p286 = scmp.eq.s32.totalorder %s23, 1
      %p287 = por %p285, %p286
      %p288 = scmp.ne.s32.totalorder %s277, %s278
      %p289 = scmp.eq.s32.totalorder %s23, 0
      %p290 = por %p288, %p289
      %p291 = scmp.ne.s32.totalorder %s277, %s278
      %p292 = scmp.eq.s32.totalorder %s24, 1
      %p293 = por %p291, %p292
      %p295 = scmp.ne.s32.totalorder %s278, %s294
      %p296 = scmp.eq.s32.totalorder %s24, 0
      %p297 = por %p295, %p296
      %p298 = scmp.le.s32.totalorder 1, %s18
      %p299 = scmp.lt.s32.totalorder %s18, 3
      %p300 = pnand %p298, %p299
      %p301 = pneg %p300
      // Predicated region
      $region9: #{tpu_custom_call.1} parent=5 // pred_check
        _
      $region10: #{tpu_custom_call.1} parent=5 // pred_check_branch
        %303 = sbr.rel (%p300) target = $region12
      $region11: #{tpu_custom_call.1} parent=5 // pred_region
        %s304 = ssub.s32 %s18, 1
        // Predicated region
        $region13: #{tpu_custom_call.1} parent=11 // pred_check
          %p305 = pneg %p56
        $region14: #{tpu_custom_call.1} parent=11 // pred_check_branch
          %307 = sbr.rel (%p305) target = $region16
        $region15: #{tpu_custom_call.1} parent=11 // pred_region
          %s308 = smul.u32 2, %s27
          %310 = vsyncadd [#allocation4], 0
          %s311 = smul.addr %s308, 8
          %s312 = scalar_lea.hbm %s0, %s311
          %s313 = sshll.u32 %s312, 4
          %s314 = int_to_ptr.hbm [resolvable:$true] %s313
          %s315 = sshll.u32 [#allocation3], 4
          %s316 = int_to_ptr.vmem [resolvable:$true] %s315
          %321 = dma.hbm_to_vmem [thread:$0]  %s314, 256, %s316, [#allocation4], 128, 128, 8
        $region16: #{tpu_custom_call.1} parent=11 // pred_fallthru
          _
        // Predicated region
        $region17: #{tpu_custom_call.1} parent=11 // pred_check
          %p322 = pneg %p82
        $region18: #{tpu_custom_call.1} parent=11 // pred_check_branch
          %324 = sbr.rel (%p322) target = $region20
        $region19: #{tpu_custom_call.1} parent=11 // pred_region
          %326 = vsyncadd [#allocation7], 0
          %s327 = smul.addr %s27, 2
          %s328 = smul.addr %s327, 8
          %s329 = scalar_lea.hbm %s1, %s328
          %s330 = sshll.u32 %s329, 4
          %s331 = int_to_ptr.hbm [resolvable:$true] %s330
          %s332 = sshll.u32 [#allocation6], 4
          %s333 = int_to_ptr.vmem [resolvable:$true] %s332
          %338 = dma.hbm_to_vmem [thread:$0]  %s331, 256, %s333, [#allocation7], 128, 128, 8
        $region20: #{tpu_custom_call.1} parent=11 // pred_fallthru
          _
      $region12: #{tpu_custom_call.1} parent=5 // pred_fallthru
        _
      %p339 = scmp.lt.s32.totalorder %s18, 2
      // Predicated region
      $region21: #{tpu_custom_call.1} parent=5 // pred_check
        %p340 = pneg %p339
      $region22: #{tpu_custom_call.1} parent=5 // pred_check_branch
        %342 = sbr.rel (%p340) target = $region24
      $region23: #{tpu_custom_call.1} parent=5 // pred_region
        // Predicated region
        $region25: #{tpu_custom_call.1} parent=23 // pred_check
          %p343 = pneg %p102
        $region26: #{tpu_custom_call.1} parent=23 // pred_check_branch
          %345 = sbr.rel (%p343) target = $region28
        $region27: #{tpu_custom_call.1} parent=23 // pred_region
          %p346 = scmp.lt.s32.totalorder %s26, 1
          %s347 = scalar_select %p346, %s26, 1
          %s348 = smul.addr %s347, 4
          %s349 = smul.addr %s348, 4
          %s350 = scalar_lea.vmem %s2, %s349
        $region28: #{tpu_custom_call.1} parent=23 // pred_fallthru
          _
        // Predicated region
        $region29: #{tpu_custom_call.1} parent=23 // pred_check
          %p351 = pneg %p128
        $region30: #{tpu_custom_call.1} parent=23 // pred_check_branch
          %353 = sbr.rel (%p351) target = $region32
        $region31: #{tpu_custom_call.1} parent=23 // pred_region
          %p354 = scmp.lt.s32.totalorder %s26, 1
          %s355 = scalar_select %p354, %s26, 1
          %s356 = scalar_lea.vmem %s3, %s355
        $region32: #{tpu_custom_call.1} parent=23 // pred_fallthru
          _
        // Predicated region
        $region33: #{tpu_custom_call.1} parent=23 // pred_check
          %p357 = pneg %p154
        $region34: #{tpu_custom_call.1} parent=23 // pred_check_branch
          %359 = sbr.rel (%p357) target = $region36
        $region35: #{tpu_custom_call.1} parent=23 // pred_region
          %p360 = scmp.lt.s32.totalorder %s26, 1
          %s361 = scalar_select %p360, %s26, 1
          %s362 = smul.addr %s361, 4
          %s363 = smul.addr %s362, 4
          %s364 = scalar_lea.vmem %s4, %s363
        $region36: #{tpu_custom_call.1} parent=23 // pred_fallthru
          _
        // Predicated region
        $region37: #{tpu_custom_call.1} parent=23 // pred_check
          %p365 = pneg %p180
        $region38: #{tpu_custom_call.1} parent=23 // pred_check_branch
          %367 = sbr.rel (%p365) target = $region40
        $region39: #{tpu_custom_call.1} parent=23 // pred_region
          %p368 = scmp.lt.s32.totalorder %s26, 1
          %s369 = scalar_select %p368, %s26, 1
          %s370 = smul.addr %s369, 4
          %s371 = smul.addr %s370, 4
          %s372 = scalar_lea.vmem %s5, %s371
        $region40: #{tpu_custom_call.1} parent=23 // pred_fallthru
          _
        // Predicated region
        $region41: #{tpu_custom_call.1} parent=23 // pred_check
          %p373 = pneg %p206
        $region42: #{tpu_custom_call.1} parent=23 // pred_check_branch
          %375 = sbr.rel (%p373) target = $region44
        $region43: #{tpu_custom_call.1} parent=23 // pred_region
          %s376 = sand.u32 %s18, 1
          %s377 = scalar_lea.sflag [#allocation4], %s376
          %s378 = sand.u32 %s196, 1
          %s379 = scalar_lea.vmem [#allocation8], %s378
          %381 = vsyncadd %s377, 0
          %s382 = scalar_lea.hbm %s6, %s26
          %s384 = sshll.u32 %s382, 4
          %s385 = int_to_ptr.hbm [resolvable:$true] %s384
          %s386 = sshll.u32 %s379, 4
          %s387 = int_to_ptr.vmem [resolvable:$true] %s386
          %389 = dma.hbm_to_vmem [thread:$0]  %s385, 16, %s387, %s377
        $region44: #{tpu_custom_call.1} parent=23 // pred_fallthru
          _
        // Predicated region
        $region45: #{tpu_custom_call.1} parent=23 // pred_check
          %p390 = pneg %p232
        $region46: #{tpu_custom_call.1} parent=23 // pred_check_branch
          %392 = sbr.rel (%p390) target = $region48
        $region47: #{tpu_custom_call.1} parent=23 // pred_region
          %p393 = scmp.lt.s32.totalorder %s26, 1
          %s394 = scalar_select %p393, %s26, 1
          %s395 = smul.addr %s394, 8
          %s396 = smul.addr %s395, 4
          %s397 = scalar_lea.vmem %s7, %s396
        $region48: #{tpu_custom_call.1} parent=23 // pred_fallthru
          _
        // Predicated region
        $region49: #{tpu_custom_call.1} parent=23 // pred_check
          %p398 = pneg %p258
        $region50: #{tpu_custom_call.1} parent=23 // pred_check_branch
          %400 = sbr.rel (%p398) target = $region52
        $region51: #{tpu_custom_call.1} parent=23 // pred_region
          %p401 = scmp.lt.s32.totalorder %s26, 1
          %s402 = scalar_select %p401, %s26, 1
          %s403 = smul.addr %s402, 8
          %s404 = scalar_lea.vmem %s8, %s403
        $region52: #{tpu_custom_call.1} parent=23 // pred_fallthru
          _
      $region24: #{tpu_custom_call.1} parent=5 // pred_fallthru
        _
      %p405 = scmp.le.s32.totalorder 1, %s18
      %p406 = scmp.lt.s32.totalorder %s18, 3
      %p407 = pnand %p405, %p406
      %p408 = pneg %p407
      // Predicated region
      $region53: #{tpu_custom_call.1} parent=5 // pred_check
        _
      $region54: #{tpu_custom_call.1} parent=5 // pred_check_branch
        %410 = sbr.rel (%p407) target = $region56
      $region55: #{tpu_custom_call.1} parent=5 // pred_region
        %s411 = ssub.s32 %s18, 1
        // Predicated region
        $region57: #{tpu_custom_call.1} parent=55 // pred_check
          %p412 = pneg %p56
        $region58: #{tpu_custom_call.1} parent=55 // pred_check_branch
          %414 = sbr.rel (%p412) target = $region60
        $region59: #{tpu_custom_call.1} parent=55 // pred_region
          %416 = dma.done [#allocation4], 256
        $region60: #{tpu_custom_call.1} parent=55 // pred_fallthru
          _
        // Predicated region
        $region61: #{tpu_custom_call.1} parent=55 // pred_check
          %p417 = pneg %p82
        $region62: #{tpu_custom_call.1} parent=55 // pred_check_branch
          %419 = sbr.rel (%p417) target = $region64
        $region63: #{tpu_custom_call.1} parent=55 // pred_region
          %421 = dma.done [#allocation7], 256
        $region64: #{tpu_custom_call.1} parent=55 // pred_fallthru
          _
        %s422 = sand.u32 %s23, 1
        %s423 = scalar_lea.sflag [#allocation4], %s422
        %s424 = sand.u32 %s199, 1
        %s425 = scalar_lea.vmem [#allocation8], %s424
        // Predicated region
        $region65: #{tpu_custom_call.1} parent=55 // pred_check
          %p426 = pneg %p212
        $region66: #{tpu_custom_call.1} parent=55 // pred_check_branch
          %428 = sbr.rel (%p426) target = $region68
        $region67: #{tpu_custom_call.1} parent=55 // pred_region
          %430 = dma.done %s423, 16
        $region68: #{tpu_custom_call.1} parent=55 // pred_fallthru
          _
        %p431 = pneg %p56
        %p432 = pneg %p53
        %p433 = pneg %p82
        %p434 = pneg %p79
        %p435 = scmp.lt.s32.totalorder %s28, 1
        %s436 = scalar_select %p435, %s28, 1
        %s437 = smul.addr %s436, 4
        %s438 = smul.addr %s437, 4
        %s439 = scalar_lea.vmem %s2, %s438
        %p440 = pneg %p108
        %p441 = pneg %p105
        %p442 = scmp.lt.s32.totalorder %s28, 1
        %s443 = scalar_select %p442, %s28, 1
        %s444 = scalar_lea.vmem %s3, %s443
        %p445 = pneg %p134
        %p446 = pneg %p131
        %p447 = scmp.lt.s32.totalorder %s28, 1
        %s448 = scalar_select %p447, %s28, 1
        %s449 = smul.addr %s448, 4
        %s450 = smul.addr %s449, 4
        %s451 = scalar_lea.vmem %s4, %s450
        %p452 = pneg %p160
        %p453 = pneg %p157
        %p454 = scmp.lt.s32.totalorder %s28, 1
        %s455 = scalar_select %p454, %s28, 1
        %s456 = smul.addr %s455, 4
        %s457 = smul.addr %s456, 4
        %s458 = scalar_lea.vmem %s5, %s457
        %p459 = pneg %p186
        %p460 = pneg %p183
        %s461 = sand.u32 %s23, 1
        %s462 = scalar_lea.sflag [#allocation4], %s461
        %s463 = sand.u32 %s199, 1
        %s464 = scalar_lea.vmem [#allocation8], %s463
        %p465 = pneg %p212
        %p466 = pneg %p209
        %p467 = scmp.lt.s32.totalorder %s28, 1
        %s468 = scalar_select %p467, %s28, 1
        %s469 = smul.addr %s468, 8
        %s470 = smul.addr %s469, 4
        %s471 = scalar_lea.vmem %s7, %s470
        %p472 = pneg %p238
        %p473 = pneg %p235
        %p474 = scmp.lt.s32.totalorder %s28, 1
        %s475 = scalar_select %p474, %s28, 1
        %s476 = smul.addr %s475, 8
        %s477 = scalar_lea.vmem %s8, %s476
        %p478 = pneg %p264
        %p479 = pneg %p261
        %p480 = pneg %p290
        %p481 = pneg %p287
        %s482 = smul.u32 2, %s27
        %p483 = scmp.lt.s32.totalorder %s28, 1
        %s484 = scalar_select %p483, %s28, 1
        %s485 = smul.addr %s484, 4
        %s486 = smul.addr %s485, 4
        %s487 = scalar_lea.vmem %s2, %s486
        %p488 = scmp.lt.s32.totalorder %s28, 1
        %s489 = scalar_select %p488, %s28, 1
        %s490 = scalar_lea.vmem %s3, %s489
        %p491 = scmp.lt.s32.totalorder %s28, 1
        %s492 = scalar_select %p491, %s28, 1
        %s493 = smul.addr %s492, 4
        %s494 = smul.addr %s493, 4
        %s495 = scalar_lea.vmem %s4, %s494
        %p496 = scmp.lt.s32.totalorder %s28, 1
        %s497 = scalar_select %p496, %s28, 1
        %s498 = smul.addr %s497, 4
        %s499 = smul.addr %s498, 4
        %s500 = scalar_lea.vmem %s5, %s499
        %p501 = scmp.lt.s32.totalorder %s28, 1
        %s502 = scalar_select %p501, %s28, 1
        %s503 = smul.addr %s502, 8
        %s504 = smul.addr %s503, 4
        %s505 = scalar_lea.vmem %s7, %s504
        %p506 = scmp.lt.s32.totalorder %s28, 1
        %s507 = scalar_select %p506, %s28, 1
        %s508 = smul.addr %s507, 8
        %s509 = scalar_lea.vmem %s8, %s508
        %s510 = smul.u32 2, %s27
        %p512 = scmp.eq.s32.totalorder %s28, 0
        // Predicated region
        $region69: #{tpu_custom_call.1} parent=55 // pred_check
          %p513 = pneg %p512
        $region70: #{tpu_custom_call.1} parent=55 // pred_check_branch
          %515 = sbr.rel (%p513) target = $region72
        $region71: #{tpu_custom_call.1} parent=55 // pred_region
          %v516 = vld [vmem:[#allocation3] sm:$0xff]
          %v517 = vld [vmem:[#allocation3 + $0x8] sm:$0xff]
          %vm518 = vcmask 261120
          %519 = vst.msk [vmem:[#allocation2] sm:$0xff] %vm518, %v516
          %520 = vst.msk [vmem:[#allocation2 + $0x8] sm:$0xff] %vm518, %v517
        $region72: #{tpu_custom_call.1} parent=55 // pred_fallthru
          _
        %v521 = vld [vmem:[#allocation2] sm:$0xff]
        %v522 = vld [vmem:[#allocation2 + $0x8] sm:$0xff]
        %v523 = vpack.c.bf16 %v522, %v521
        %v524 = vld [vmem:[#allocation6] sm:$0xff]
        %v525 = vld [vmem:[#allocation6 + $0x8] sm:$0xff]
        %v526 = vld [vmem:[%s509] sm:$0x3f]
        %v527 = vld [vmem:[%s487] sm:$0xf]
        %v528 = vld [vmem:[%s487 + $0x4] sm:$0xf]
        %v529 = vld [vmem:[%s487 + $0x8] sm:$0xf]
        %v530 = vld [vmem:[%s487 + $0xc] sm:$0xf]
        %v531 = vld [vmem:[%s490] sm:$0x1]
        %v533 = vperm.slane %v531, 0
        %v539 = vunpack.c.l.b16 %v527
        %v540 = vunpack.c.l.b16 %v528
        %v541 = vunpack.c.l.b16 %v529
        %v542 = vunpack.c.l.b16 %v530
        %v543 = vpack.c.b16 %v540, %v539
        %v544 = vpack.c.b16 %v542, %v541
        %vm547 = vcmask 261120
        %v549 = vsel %vm547, %v523, 0
        %551 = vmatpush.bf16.msra.mxu0 0
        %552 = vmatpush.bf16.msra.mxu0 0
        %553 = vmatpush.bf16.msra.mxu0 0
        %554 = vmatpush.bf16.msra.mxu0 0
        %555 = vmatpush.bf16.msra.mxu0 0
        %556 = vmatpush.bf16.msra.mxu0 0
        %557 = vmatpush.bf16.msra.mxu0 %v544
        %558 = vmatpush.bf16.msra.mxu0 %v543
        %559 = vmatmul.bf16.gmra.mxu0 %v549
        %v560 = vpop.f32.mrf.mxu0
        %v561 = vadd.f32 %v533, %v560
        %v562 = vpop.f32.mrf.mxu0
        %v563 = vadd.f32 %v533, %v562
        %564 = vdwg.mxu0
        %567 = vrot.lane.b32.xlu0 %v561, 104
        %v568 = vpop.permute.xlu0 %567
        %569 = vrot.lane.b32.xlu0 %v563, 104
        %v570 = vpop.permute.xlu0 %569
        %573 = vrot.lane.b32.xlu0 %v561, 80
        %v574 = vpop.permute.xlu0 %573
        %575 = vrot.lane.b32.xlu0 %v563, 80
        %v576 = vpop.permute.xlu0 %575
        %579 = vrot.lane.b32.xlu0 %v561, 56
        %v580 = vpop.permute.xlu0 %579
        %581 = vrot.lane.b32.xlu0 %v563, 56
        %v582 = vpop.permute.xlu0 %581
        %v585 = vrot.slane %v574, 4
        %vm586 = vcmask 1047556
        %v587 = vsel %vm586, %v585, %v561
        %v588 = vrot.slane %v561, 4
        %v589 = vsel %vm586, %v574, %v588
        %v591 = vunpack.c.l.s4 1983009808
        %v592 = vunpack.c.0.s8 %v591
        %v593 = vperm.slane %v587, %v592
        %v595 = vunpack.c.l.s4 1983009808
        %v596 = vunpack.c.0.s8 %v595
        %v597 = vperm.slane %v589, %v596
        %v598 = vrot.slane %v580, 4
        %v599 = vsel %vm586, %v598, %v568
        %v600 = vrot.slane %v568, 4
        %v601 = vsel %vm586, %v580, %v600
        %v603 = vunpack.c.l.s4 1983009808
        %v604 = vunpack.c.0.s8 %v603
        %v605 = vperm.slane %v599, %v604
        %v607 = vunpack.c.l.s4 1983009808
        %v608 = vunpack.c.0.s8 %v607
        %v609 = vperm.slane %v601, %v608
        %v610 = vrot.slane %v605, 4
        %v611 = vsel %vm586, %v610, %v593
        %v612 = vrot.slane %v593, 4
        %v613 = vsel %vm586, %v605, %v612
        %v615 = vunpack.c.l.s4 1934713408
        %v616 = vunpack.c.0.s8 %v615
        %v617 = vperm.slane %v611, %v616
        %v619 = vunpack.c.l.s4 1934713408
        %v620 = vunpack.c.0.s8 %v619
        %v621 = vperm.slane %v613, %v620
        %v622 = vrot.slane %v609, 4
        %v623 = vsel %vm586, %v622, %v597
        %v624 = vrot.slane %v597, 4
        %v625 = vsel %vm586, %v609, %v624
        %v627 = vunpack.c.l.s4 1934713408
        %v628 = vunpack.c.0.s8 %v627
        %v629 = vperm.slane %v623, %v628
        %v631 = vunpack.c.l.s4 1934713408
        %v632 = vunpack.c.0.s8 %v631
        %v633 = vperm.slane %v625, %v632
        %v634 = vrot.slane %v617, 4
        %v635 = vsel %vm586, 0.0, %v634
        %v636 = vrot.slane %v621, 4
        %v637 = vsel %vm586, 0.0, %v636
        %v638 = vrot.slane %v629, 4
        %v639 = vsel %vm586, 0.0, %v638
        %v640 = vrot.slane %v633, 4
        %v641 = vsel %vm586, 0.0, %v640
        %v642 = vrot.slane %v576, 4
        %v643 = vsel %vm586, %v642, %v563
        %v644 = vrot.slane %v563, 4
        %v645 = vsel %vm586, %v576, %v644
        %v647 = vunpack.c.l.s4 1983009808
        %v648 = vunpack.c.0.s8 %v647
        %v649 = vperm.slane %v643, %v648
        %v651 = vunpack.c.l.s4 1983009808
        %v652 = vunpack.c.0.s8 %v651
        %v653 = vperm.slane %v645, %v652
        %v654 = vrot.slane %v582, 4
        %v655 = vsel %vm586, %v654, %v570
        %v656 = vrot.slane %v570, 4
        %v657 = vsel %vm586, %v582, %v656
        %v659 = vunpack.c.l.s4 1983009808
        %v660 = vunpack.c.0.s8 %v659
        %v661 = vperm.slane %v655, %v660
        %v663 = vunpack.c.l.s4 1983009808
        %v664 = vunpack.c.0.s8 %v663
        %v665 = vperm.slane %v657, %v664
        %v666 = vrot.slane %v661, 4
        %v667 = vsel %vm586, %v666, %v649
        %v668 = vrot.slane %v649, 4
        %v669 = vsel %vm586, %v661, %v668
        %v671 = vunpack.c.l.s4 1934713408
        %v672 = vunpack.c.0.s8 %v671
        %v673 = vperm.slane %v667, %v672
        %v675 = vunpack.c.l.s4 1934713408
        %v676 = vunpack.c.0.s8 %v675
        %v677 = vperm.slane %v669, %v676
        %v678 = vrot.slane %v665, 4
        %v679 = vsel %vm586, %v678, %v653
        %v680 = vrot.slane %v653, 4
        %v681 = vsel %vm586, %v665, %v680
        %v683 = vunpack.c.l.s4 1934713408
        %v684 = vunpack.c.0.s8 %v683
        %v685 = vperm.slane %v679, %v684
        %v687 = vunpack.c.l.s4 1934713408
        %v688 = vunpack.c.0.s8 %v687
        %v689 = vperm.slane %v681, %v688
        %v690 = vrot.slane %v673, 4
        %v691 = vsel %vm586, 0.0, %v690
        %v692 = vrot.slane %v677, 4
        %v693 = vsel %vm586, 0.0, %v692
        %v694 = vrot.slane %v685, 4
        %v695 = vsel %vm586, 0.0, %v694
        %v696 = vrot.slane %v689, 4
        %v697 = vsel %vm586, 0.0, %v696
        %v698 = vsel %vm586, %v636, %v617
        %v700 = vunpack.c.l.s4 1983009808
        %v701 = vunpack.c.0.s8 %v700
        %v702 = vperm.slane %v698, %v701
        %v703 = vrot.slane %v637, 4
        %v704 = vsel %vm586, %v703, %v635
        %v706 = vunpack.c.l.s4 1983009808
        %v707 = vunpack.c.0.s8 %v706
        %v708 = vperm.slane %v704, %v707
        %v709 = vsel %vm586, %v640, %v629
        %v711 = vunpack.c.l.s4 1983009808
        %v712 = vunpack.c.0.s8 %v711
        %v713 = vperm.slane %v709, %v712
        %v714 = vrot.slane %v641, 4
        %v715 = vsel %vm586, %v714, %v639
        %v717 = vunpack.c.l.s4 1983009808
        %v718 = vunpack.c.0.s8 %v717
        %v719 = vperm.slane %v715, %v718
        %v720 = vrot.slane %v708, 4
        %v721 = vsel %vm586, %v720, %v702
        %v722 = vrot.slane %v702, 4
        %v723 = vsel %vm586, %v708, %v722
        %v725 = vunpack.c.l.s4 1934713408
        %v726 = vunpack.c.0.s8 %v725
        %v727 = vperm.slane %v721, %v726
        %v729 = vunpack.c.l.s4 1934713408
        %v730 = vunpack.c.0.s8 %v729
        %v731 = vperm.slane %v723, %v730
        %v732 = vrot.slane %v719, 4
        %v733 = vsel %vm586, %v732, %v713
        %v734 = vrot.slane %v713, 4
        %v735 = vsel %vm586, %v719, %v734
        %v737 = vunpack.c.l.s4 1934713408
        %v738 = vunpack.c.0.s8 %v737
        %v739 = vperm.slane %v733, %v738
        %v741 = vunpack.c.l.s4 1934713408
        %v742 = vunpack.c.0.s8 %v741
        %v743 = vperm.slane %v735, %v742
        %v744 = vrot.slane %v739, 4
        %v745 = vsel %vm586, %v744, %v727
        %v746 = vrot.slane %v727, 4
        %v747 = vsel %vm586, %v739, %v746
        %v748 = vrot.slane %v743, 4
        %v749 = vsel %vm586, %v748, %v731
        %v750 = vrot.slane %v731, 4
        %v751 = vsel %vm586, %v743, %v750
        %v752 = vsel %vm586, %v692, %v673
        %v754 = vunpack.c.l.s4 1983009808
        %v755 = vunpack.c.0.s8 %v754
        %v756 = vperm.slane %v752, %v755
        %v757 = vrot.slane %v693, 4
        %v758 = vsel %vm586, %v757, %v691
        %v760 = vunpack.c.l.s4 1983009808
        %v761 = vunpack.c.0.s8 %v760
        %v762 = vperm.slane %v758, %v761
        %v763 = vsel %vm586, %v696, %v685
        %v765 = vunpack.c.l.s4 1983009808
        %v766 = vunpack.c.0.s8 %v765
        %v767 = vperm.slane %v763, %v766
        %v768 = vrot.slane %v697, 4
        %v769 = vsel %vm586, %v768, %v695
        %v771 = vunpack.c.l.s4 1983009808
        %v772 = vunpack.c.0.s8 %v771
        %v773 = vperm.slane %v769, %v772
        %v774 = vrot.slane %v762, 4
        %v775 = vsel %vm586, %v774, %v756
        %v776 = vrot.slane %v756, 4
        %v777 = vsel %vm586, %v762, %v776
        %v779 = vunpack.c.l.s4 1934713408
        %v780 = vunpack.c.0.s8 %v779
        %v781 = vperm.slane %v775, %v780
        %v783 = vunpack.c.l.s4 1934713408
        %v784 = vunpack.c.0.s8 %v783
        %v785 = vperm.slane %v777, %v784
        %v786 = vrot.slane %v773, 4
        %v787 = vsel %vm586, %v786, %v767
        %v788 = vrot.slane %v767, 4
        %v789 = vsel %vm586, %v773, %v788
        %v791 = vunpack.c.l.s4 1934713408
        %v792 = vunpack.c.0.s8 %v791
        %v793 = vperm.slane %v787, %v792
        %v795 = vunpack.c.l.s4 1934713408
        %v796 = vunpack.c.0.s8 %v795
        %v797 = vperm.slane %v789, %v796
        %v798 = vrot.slane %v793, 4
        %v799 = vsel %vm586, %v798, %v781
        %v800 = vrot.slane %v781, 4
        %v801 = vsel %vm586, %v793, %v800
        %v802 = vrot.slane %v797, 4
        %v803 = vsel %vm586, %v802, %v785
        %v804 = vrot.slane %v785, 4
        %v805 = vsel %vm586, %v797, %v804
        %v806 = vmul.f32 %v745, 0.35355338
        %v807 = vmul.f32 %v799, 0.35355338
        %v808 = vmul.f32 %v747, 0.35355338
        %v809 = vmul.f32 %v801, 0.35355338
        %v810 = vmul.f32 %v749, 0.35355338
        %v811 = vmul.f32 %v803, 0.35355338
        %v812 = vmul.f32 %v751, 0.35355338
        %v813 = vmul.f32 %v805, 0.35355338
        %v814 = vpack.c.bf16 %v806, %v806
        %v815 = vpack.c.bf16 %v807, %v807
        %v816 = vpack.c.bf16 %v808, %v808
        %v817 = vpack.c.bf16 %v809, %v809
        %v818 = vpack.c.bf16 %v810, %v810
        %v819 = vpack.c.bf16 %v811, %v811
        %v820 = vpack.c.bf16 %v812, %v812
        %v821 = vpack.c.bf16 %v813, %v813
        %v822 = vpack.c.bf16 %v745, %v745
        %v823 = vpack.c.bf16 %v799, %v799
        %v824 = vpack.c.bf16 %v747, %v747
        %v825 = vpack.c.bf16 %v801, %v801
        %v826 = vpack.c.bf16 %v749, %v749
        %v827 = vpack.c.bf16 %v803, %v803
        %v828 = vpack.c.bf16 %v751, %v751
        %v829 = vpack.c.bf16 %v805, %v805
        %v832 = vunpack.c.l.b16 %v814
        %v833 = vunpack.c.l.b16 %v815
        %v834 = vpack.c.b16 %v833, %v832
        %v837 = vunpack.c.l.b16 %v822
        %v838 = vunpack.c.l.b16 %v823
        %v839 = vpack.c.b16 %v838, %v837
        %840 = vrot.lane.b32.xlu0 %v839, 120
        %v841 = vpop.permute.xlu0 %840
        %vm842 = vcmask 64512
        %v844 = vsel %vm842, %v834, 0
        %v847 = vsel %vm842, %v841, 0
        %849 = vmatpush.bf16.xpose.msra.mxu0 0
        %850 = vmatpush.bf16.xpose.msra.mxu0 0
        %851 = vmatpush.bf16.xpose.msra.mxu0 0
        %852 = vmatpush.bf16.xpose.msra.mxu0 0
        %853 = vmatpush.bf16.xpose.msra.mxu0 0
        %854 = vmatpush.bf16.xpose.msra.mxu0 0
        %855 = vmatpush.bf16.xpose.msra.mxu0 0
        %856 = vmatpush.bf16.xpose.msra.mxu0 %v847
        %857 = vmatmul.bf16.gmra.mxu0 %v844
        %v858 = vpop.f32.mrf.mxu0
        %v859 = vadd.f32 %v524, %v858
        %v860 = vpop.f32.mrf.mxu0
        %v861 = vadd.f32 %v525, %v860
        %862 = vdwg.mxu0
        %v865 = vunpack.c.l.b16 %v816
        %v866 = vunpack.c.l.b16 %v817
        %v867 = vpack.c.b16 %v866, %v865
        %v870 = vunpack.c.l.b16 %v824
        %v871 = vunpack.c.l.b16 %v825
        %v872 = vpack.c.b16 %v871, %v870
        %873 = vrot.lane.b32.xlu0 %v872, 120
        %v874 = vpop.permute.xlu0 %873
        %v876 = vsel %vm842, %v867, 0
        %v879 = vsel %vm842, %v874, 0
        %881 = vmatpush.bf16.xpose.msra.mxu0 0
        %882 = vmatpush.bf16.xpose.msra.mxu0 0
        %883 = vmatpush.bf16.xpose.msra.mxu0 0
        %884 = vmatpush.bf16.xpose.msra.mxu0 0
        %885 = vmatpush.bf16.xpose.msra.mxu0 0
        %886 = vmatpush.bf16.xpose.msra.mxu0 0
        %887 = vmatpush.bf16.xpose.msra.mxu0 0
        %888 = vmatpush.bf16.xpose.msra.mxu0 %v879
        %889 = vmatmul.bf16.gmra.mxu0 %v876
        %v890 = vpop.f32.mrf.mxu0
        %v891 = vadd.f32 %v524, %v890
        %v892 = vpop.f32.mrf.mxu0
        %v893 = vadd.f32 %v525, %v892
        %894 = vdwg.mxu0
        %v897 = vunpack.c.l.b16 %v818
        %v898 = vunpack.c.l.b16 %v819
        %v899 = vpack.c.b16 %v898, %v897
        %v902 = vunpack.c.l.b16 %v826
        %v903 = vunpack.c.l.b16 %v827
        %v904 = vpack.c.b16 %v903, %v902
        %905 = vrot.lane.b32.xlu0 %v904, 120
        %v906 = vpop.permute.xlu0 %905
        %v908 = vsel %vm842, %v899, 0
        %v911 = vsel %vm842, %v906, 0
        %913 = vmatpush.bf16.xpose.msra.mxu0 0
        %914 = vmatpush.bf16.xpose.msra.mxu0 0
        %915 = vmatpush.bf16.xpose.msra.mxu0 0
        %916 = vmatpush.bf16.xpose.msra.mxu0 0
        %917 = vmatpush.bf16.xpose.msra.mxu0 0
        %918 = vmatpush.bf16.xpose.msra.mxu0 0
        %919 = vmatpush.bf16.xpose.msra.mxu0 0
        %920 = vmatpush.bf16.xpose.msra.mxu0 %v911
        %921 = vmatmul.bf16.gmra.mxu0 %v908
        %v922 = vpop.f32.mrf.mxu0
        %v923 = vadd.f32 %v524, %v922
        %v924 = vpop.f32.mrf.mxu0
        %v925 = vadd.f32 %v525, %v924
        %926 = vdwg.mxu0
        %v929 = vunpack.c.l.b16 %v820
        %v930 = vunpack.c.l.b16 %v821
        %v931 = vpack.c.b16 %v930, %v929
        %v934 = vunpack.c.l.b16 %v828
        %v935 = vunpack.c.l.b16 %v829
        %v936 = vpack.c.b16 %v935, %v934
        %937 = vrot.lane.b32.xlu0 %v936, 120
        %v938 = vpop.permute.xlu0 %937
        %v940 = vsel %vm842, %v931, 0
        %v943 = vsel %vm842, %v938, 0
        %945 = vmatpush.bf16.xpose.msra.mxu0 0
        %946 = vmatpush.bf16.xpose.msra.mxu0 0
        %947 = vmatpush.bf16.xpose.msra.mxu0 0
        %948 = vmatpush.bf16.xpose.msra.mxu0 0
        %949 = vmatpush.bf16.xpose.msra.mxu0 0
        %950 = vmatpush.bf16.xpose.msra.mxu0 0
        %951 = vmatpush.bf16.xpose.msra.mxu0 0
        %952 = vmatpush.bf16.xpose.msra.mxu0 %v943
        %953 = vmatmul.bf16.gmra.mxu0 %v940
        %v954 = vpop.f32.mrf.mxu0
        %v955 = vadd.f32 %v524, %v954
        %v956 = vpop.f32.mrf.mxu0
        %v957 = vadd.f32 %v525, %v956
        %958 = vdwg.mxu0
        %vm959 = vcmask 130048
        %v960 = vsel %vm959, %v859, -inf
        %961 = vmax.xlane.f32.xlu0 %v960
        %v962 = vpop.xlane.xlu0 %961
        %v963 = vsel %vm959, %v861, -inf
        %964 = vmax.xlane.f32.xlu0 %v963
        %v965 = vpop.xlane.xlu0 %964
        %v966 = vsel %vm959, %v891, -inf
        %967 = vmax.xlane.f32.xlu0 %v966
        %v968 = vpop.xlane.xlu0 %967
        %v969 = vsel %vm959, %v893, -inf
        %970 = vmax.xlane.f32.xlu0 %v969
        %v971 = vpop.xlane.xlu0 %970
        %v972 = vsel %vm959, %v923, -inf
        %973 = vmax.xlane.f32.xlu0 %v972
        %v974 = vpop.xlane.xlu0 %973
        %v975 = vsel %vm959, %v925, -inf
        %976 = vmax.xlane.f32.xlu0 %v975
        %v977 = vpop.xlane.xlu0 %976
        %v978 = vsel %vm959, %v955, -inf
        %979 = vmax.xlane.f32.xlu0 %v978
        %v980 = vpop.xlane.xlu0 %979
        %v981 = vsel %vm959, %v957, -inf
        %982 = vmax.xlane.f32.xlu0 %v981
        %v983 = vpop.xlane.xlu0 %982
        %v984 = vsub.f32 %v859, %v962
        %v985 = vsub.f32 %v861, %v965
        %v986 = vsub.f32 %v891, %v968
        %v987 = vsub.f32 %v893, %v971
        %v988 = vsub.f32 %v923, %v974
        %v989 = vsub.f32 %v925, %v977
        %v990 = vsub.f32 %v955, %v980
        %v991 = vsub.f32 %v957, %v983
        %v992 = vmul.f32 %v984, 1.442695
        %v993 = vpow.pop %v992
        %v994 = vmul.f32 %v985, 1.442695
        %v995 = vpow.pop %v994
        %v996 = vmul.f32 %v986, 1.442695
        %v997 = vpow.pop %v996
        %v998 = vmul.f32 %v987, 1.442695
        %v999 = vpow.pop %v998
        %v1000 = vmul.f32 %v988, 1.442695
        %v1001 = vpow.pop %v1000
        %v1002 = vmul.f32 %v989, 1.442695
        %v1003 = vpow.pop %v1002
        %v1004 = vmul.f32 %v990, 1.442695
        %v1005 = vpow.pop %v1004
        %v1006 = vmul.f32 %v991, 1.442695
        %v1007 = vpow.pop %v1006
        %v1008 = vsel %vm959, %v993, 0.0
        %1009 = vadd.xlane.f32.xlu0 %v1008
        %v1010 = vpop.xlane.xlu0 %1009
        %v1011 = vsel %vm959, %v995, 0.0
        %1012 = vadd.xlane.f32.xlu0 %v1011
        %v1013 = vpop.xlane.xlu0 %1012
        %v1014 = vsel %vm959, %v997, 0.0
        %1015 = vadd.xlane.f32.xlu0 %v1014
        %v1016 = vpop.xlane.xlu0 %1015
        %v1017 = vsel %vm959, %v999, 0.0
        %1018 = vadd.xlane.f32.xlu0 %v1017
        %v1019 = vpop.xlane.xlu0 %1018
        %v1020 = vsel %vm959, %v1001, 0.0
        %1021 = vadd.xlane.f32.xlu0 %v1020
        %v1022 = vpop.xlane.xlu0 %1021
        %v1023 = vsel %vm959, %v1003, 0.0
        %1024 = vadd.xlane.f32.xlu0 %v1023
        %v1025 = vpop.xlane.xlu0 %1024
        %v1026 = vsel %vm959, %v1005, 0.0
        %1027 = vadd.xlane.f32.xlu0 %v1026
        %v1028 = vpop.xlane.xlu0 %1027
        %v1029 = vsel %vm959, %v1007, 0.0
        %1030 = vadd.xlane.f32.xlu0 %v1029
        %v1031 = vpop.xlane.xlu0 %1030
        %v1032 = vrcp.pop %v1010
        %v1033 = vrcp.pop %v1013
        %v1034 = vrcp.pop %v1016
        %v1035 = vrcp.pop %v1019
        %v1036 = vrcp.pop %v1022
        %v1037 = vrcp.pop %v1025
        %v1038 = vrcp.pop %v1028
        %v1039 = vrcp.pop %v1031
        %v1040 = vmul.f32 %v993, %v1032
        %v1041 = vmul.f32 %v995, %v1033
        %v1042 = vmul.f32 %v997, %v1034
        %v1043 = vmul.f32 %v999, %v1035
        %v1044 = vmul.f32 %v1001, %v1036
        %v1045 = vmul.f32 %v1003, %v1037
        %v1046 = vmul.f32 %v1005, %v1038
        %v1047 = vmul.f32 %v1007, %v1039
        %v1048 = vpack.c.bf16 %v1040, %v1040
        %v1049 = vpack.c.bf16 %v1041, %v1041
        %v1050 = vpack.c.bf16 %v1042, %v1042
        %v1051 = vpack.c.bf16 %v1043, %v1043
        %v1052 = vpack.c.bf16 %v1044, %v1044
        %v1053 = vpack.c.bf16 %v1045, %v1045
        %v1054 = vpack.c.bf16 %v1046, %v1046
        %v1055 = vpack.c.bf16 %v1047, %v1047
        %v1058 = vunpack.c.l.b16 %v1048
        %v1059 = vunpack.c.l.b16 %v1049
        %v1060 = vpack.c.b16 %v1059, %v1058
        %1061 = vrot.lane.b32.xlu0 %v839, 112
        %v1062 = vpop.permute.xlu0 %1061
        %v1065 = vsel %vm959, %v1060, 0
        %1067 = vmatpush.bf16.msra.mxu0 0
        %1068 = vmatpush.bf16.msra.mxu0 0
        %1069 = vmatpush.bf16.msra.mxu0 0
        %1070 = vmatpush.bf16.msra.mxu0 0
        %1071 = vmatpush.bf16.msra.mxu0 0
        %1072 = vmatpush.bf16.msra.mxu0 0
        %1073 = vmatpush.bf16.msra.mxu0 0
        %1074 = vmatpush.bf16.msra.mxu0 %v1062
        %1075 = vmatmul.bf16.gmra.mxu0 %v1065
        %v1076 = vpop.f32.mrf.mxu0
        %v1077 = vadd.f32 0.0, %v1076
        %v1078 = vpop.f32.mrf.mxu0
        %v1079 = vadd.f32 0.0, %v1078
        %1080 = vdwg.mxu0
        %v1083 = vunpack.c.l.b16 %v1050
        %v1084 = vunpack.c.l.b16 %v1051
        %v1085 = vpack.c.b16 %v1084, %v1083
        %1086 = vrot.lane.b32.xlu0 %v872, 112
        %v1087 = vpop.permute.xlu0 %1086
        %v1090 = vsel %vm959, %v1085, 0
        %1092 = vmatpush.bf16.msra.mxu0 0
        %1093 = vmatpush.bf16.msra.mxu0 0
        %1094 = vmatpush.bf16.msra.mxu0 0
        %1095 = vmatpush.bf16.msra.mxu0 0
        %1096 = vmatpush.bf16.msra.mxu0 0
        %1097 = vmatpush.bf16.msra.mxu0 0
        %1098 = vmatpush.bf16.msra.mxu0 0
        %1099 = vmatpush.bf16.msra.mxu0 %v1087
        %1100 = vmatmul.bf16.gmra.mxu0 %v1090
        %v1101 = vpop.f32.mrf.mxu0
        %v1102 = vadd.f32 0.0, %v1101
        %v1103 = vpop.f32.mrf.mxu0
        %v1104 = vadd.f32 0.0, %v1103
        %1105 = vdwg.mxu0
        %v1108 = vunpack.c.l.b16 %v1052
        %v1109 = vunpack.c.l.b16 %v1053
        %v1110 = vpack.c.b16 %v1109, %v1108
        %1111 = vrot.lane.b32.xlu0 %v904, 112
        %v1112 = vpop.permute.xlu0 %1111
        %v1115 = vsel %vm959, %v1110, 0
        %1117 = vmatpush.bf16.msra.mxu0 0
        %1118 = vmatpush.bf16.msra.mxu0 0
        %1119 = vmatpush.bf16.msra.mxu0 0
        %1120 = vmatpush.bf16.msra.mxu0 0
        %1121 = vmatpush.bf16.msra.mxu0 0
        %1122 = vmatpush.bf16.msra.mxu0 0
        %1123 = vmatpush.bf16.msra.mxu0 0
        %1124 = vmatpush.bf16.msra.mxu0 %v1112
        %1125 = vmatmul.bf16.gmra.mxu0 %v1115
        %v1126 = vpop.f32.mrf.mxu0
        %v1127 = vadd.f32 0.0, %v1126
        %v1128 = vpop.f32.mrf.mxu0
        %v1129 = vadd.f32 0.0, %v1128
        %1130 = vdwg.mxu0
        %v1133 = vunpack.c.l.b16 %v1054
        %v1134 = vunpack.c.l.b16 %v1055
        %v1135 = vpack.c.b16 %v1134, %v1133
        %1136 = vrot.lane.b32.xlu0 %v936, 112
        %v1137 = vpop.permute.xlu0 %1136
        %v1140 = vsel %vm959, %v1135, 0
        %1142 = vmatpush.bf16.msra.mxu0 0
        %1143 = vmatpush.bf16.msra.mxu0 0
        %1144 = vmatpush.bf16.msra.mxu0 0
        %1145 = vmatpush.bf16.msra.mxu0 0
        %1146 = vmatpush.bf16.msra.mxu0 0
        %1147 = vmatpush.bf16.msra.mxu0 0
        %1148 = vmatpush.bf16.msra.mxu0 0
        %1149 = vmatpush.bf16.msra.mxu0 %v1137
        %1150 = vmatmul.bf16.gmra.mxu0 %v1140
        %v1151 = vpop.f32.mrf.mxu0
        %v1152 = vadd.f32 0.0, %v1151
        %v1153 = vpop.f32.mrf.mxu0
        %v1154 = vadd.f32 0.0, %v1153
        %1155 = vdwg.mxu0
        %v1156 = vrot.slane %v1127, 4
        %v1157 = vsel %vm586, %v1156, %v1077
        %v1158 = vrot.slane %v1077, 4
        %v1159 = vsel %vm586, %v1127, %v1158
        %v1161 = vunpack.c.l.s4 1983009808
        %v1162 = vunpack.c.0.s8 %v1161
        %v1163 = vperm.slane %v1157, %v1162
        %v1165 = vunpack.c.l.s4 1983009808
        %v1166 = vunpack.c.0.s8 %v1165
        %v1167 = vperm.slane %v1159, %v1166
        %v1168 = vrot.slane %v1152, 4
        %v1169 = vsel %vm586, %v1168, %v1102
        %v1170 = vrot.slane %v1102, 4
        %v1171 = vsel %vm586, %v1152, %v1170
        %v1173 = vunpack.c.l.s4 1983009808
        %v1174 = vunpack.c.0.s8 %v1173
        %v1175 = vperm.slane %v1169, %v1174
        %v1177 = vunpack.c.l.s4 1983009808
        %v1178 = vunpack.c.0.s8 %v1177
        %v1179 = vperm.slane %v1171, %v1178
        %v1180 = vrot.slane %v1175, 4
        %v1181 = vsel %vm586, %v1180, %v1163
        %v1182 = vrot.slane %v1163, 4
        %v1183 = vsel %vm586, %v1175, %v1182
        %v1185 = vunpack.c.l.s4 1934713408
        %v1186 = vunpack.c.0.s8 %v1185
        %v1187 = vperm.slane %v1181, %v1186
        %v1189 = vunpack.c.l.s4 1934713408
        %v1190 = vunpack.c.0.s8 %v1189
        %v1191 = vperm.slane %v1183, %v1190
        %v1192 = vrot.slane %v1179, 4
        %v1193 = vsel %vm586, %v1192, %v1167
        %v1194 = vrot.slane %v1167, 4
        %v1195 = vsel %vm586, %v1179, %v1194
        %v1197 = vunpack.c.l.s4 1934713408
        %v1198 = vunpack.c.0.s8 %v1197
        %v1199 = vperm.slane %v1193, %v1198
        %v1201 = vunpack.c.l.s4 1934713408
        %v1202 = vunpack.c.0.s8 %v1201
        %v1203 = vperm.slane %v1195, %v1202
        %v1204 = vrot.slane %v1187, 4
        %v1205 = vsel %vm586, 0.0, %v1204
        %v1206 = vrot.slane %v1191, 4
        %v1207 = vsel %vm586, 0.0, %v1206
        %v1208 = vrot.slane %v1199, 4
        %v1209 = vsel %vm586, 0.0, %v1208
        %v1210 = vrot.slane %v1203, 4
        %v1211 = vsel %vm586, 0.0, %v1210
        %v1212 = vrot.slane %v1129, 4
        %v1213 = vsel %vm586, %v1212, %v1079
        %v1214 = vrot.slane %v1079, 4
        %v1215 = vsel %vm586, %v1129, %v1214
        %v1217 = vunpack.c.l.s4 1983009808
        %v1218 = vunpack.c.0.s8 %v1217
        %v1219 = vperm.slane %v1213, %v1218
        %v1221 = vunpack.c.l.s4 1983009808
        %v1222 = vunpack.c.0.s8 %v1221
        %v1223 = vperm.slane %v1215, %v1222
        %v1224 = vrot.slane %v1154, 4
        %v1225 = vsel %vm586, %v1224, %v1104
        %v1226 = vrot.slane %v1104, 4
        %v1227 = vsel %vm586, %v1154, %v1226
        %v1229 = vunpack.c.l.s4 1983009808
        %v1230 = vunpack.c.0.s8 %v1229
        %v1231 = vperm.slane %v1225, %v1230
        %v1233 = vunpack.c.l.s4 1983009808
        %v1234 = vunpack.c.0.s8 %v1233
        %v1235 = vperm.slane %v1227, %v1234
        %v1236 = vrot.slane %v1231, 4
        %v1237 = vsel %vm586, %v1236, %v1219
        %v1238 = vrot.slane %v1219, 4
        %v1239 = vsel %vm586, %v1231, %v1238
        %v1241 = vunpack.c.l.s4 1934713408
        %v1242 = vunpack.c.0.s8 %v1241
        %v1243 = vperm.slane %v1237, %v1242
        %v1245 = vunpack.c.l.s4 1934713408
        %v1246 = vunpack.c.0.s8 %v1245
        %v1247 = vperm.slane %v1239, %v1246
        %v1248 = vrot.slane %v1235, 4
        %v1249 = vsel %vm586, %v1248, %v1223
        %v1250 = vrot.slane %v1223, 4
        %v1251 = vsel %vm586, %v1235, %v1250
        %v1253 = vunpack.c.l.s4 1934713408
        %v1254 = vunpack.c.0.s8 %v1253
        %v1255 = vperm.slane %v1249, %v1254
        %v1257 = vunpack.c.l.s4 1934713408
        %v1258 = vunpack.c.0.s8 %v1257
        %v1259 = vperm.slane %v1251, %v1258
        %v1260 = vrot.slane %v1243, 4
        %v1261 = vsel %vm586, 0.0, %v1260
        %v1262 = vrot.slane %v1247, 4
        %v1263 = vsel %vm586, 0.0, %v1262
        %v1264 = vrot.slane %v1255, 4
        %v1265 = vsel %vm586, 0.0, %v1264
        %v1266 = vrot.slane %v1259, 4
        %v1267 = vsel %vm586, 0.0, %v1266
        %v1268 = vsel %vm586, %v1206, %v1187
        %v1270 = vunpack.c.l.s4 1983009808
        %v1271 = vunpack.c.0.s8 %v1270
        %v1272 = vperm.slane %v1268, %v1271
        %v1273 = vrot.slane %v1207, 4
        %v1274 = vsel %vm586, %v1273, %v1205
        %v1276 = vunpack.c.l.s4 1983009808
        %v1277 = vunpack.c.0.s8 %v1276
        %v1278 = vperm.slane %v1274, %v1277
        %v1279 = vsel %vm586, %v1210, %v1199
        %v1281 = vunpack.c.l.s4 1983009808
        %v1282 = vunpack.c.0.s8 %v1281
        %v1283 = vperm.slane %v1279, %v1282
        %v1284 = vrot.slane %v1211, 4
        %v1285 = vsel %vm586, %v1284, %v1209
        %v1287 = vunpack.c.l.s4 1983009808
        %v1288 = vunpack.c.0.s8 %v1287
        %v1289 = vperm.slane %v1285, %v1288
        %v1290 = vrot.slane %v1278, 4
        %v1291 = vsel %vm586, %v1290, %v1272
        %v1292 = vrot.slane %v1272, 4
        %v1293 = vsel %vm586, %v1278, %v1292
        %v1295 = vunpack.c.l.s4 1934713408
        %v1296 = vunpack.c.0.s8 %v1295
        %v1297 = vperm.slane %v1291, %v1296
        %v1299 = vunpack.c.l.s4 1934713408
        %v1300 = vunpack.c.0.s8 %v1299
        %v1301 = vperm.slane %v1293, %v1300
        %v1302 = vrot.slane %v1289, 4
        %v1303 = vsel %vm586, %v1302, %v1283
        %v1304 = vrot.slane %v1283, 4
        %v1305 = vsel %vm586, %v1289, %v1304
        %v1307 = vunpack.c.l.s4 1934713408
        %v1308 = vunpack.c.0.s8 %v1307
        %v1309 = vperm.slane %v1303, %v1308
        %v1311 = vunpack.c.l.s4 1934713408
        %v1312 = vunpack.c.0.s8 %v1311
        %v1313 = vperm.slane %v1305, %v1312
        %v1314 = vrot.slane %v1309, 4
        %v1315 = vsel %vm586, %v1314, %v1297
        %v1316 = vrot.slane %v1297, 4
        %v1317 = vsel %vm586, %v1309, %v1316
        %v1318 = vrot.slane %v1313, 4
        %v1319 = vsel %vm586, %v1318, %v1301
        %v1320 = vrot.slane %v1301, 4
        %v1321 = vsel %vm586, %v1313, %v1320
        %v1322 = vsel %vm586, %v1262, %v1243
        %v1324 = vunpack.c.l.s4 1983009808
        %v1325 = vunpack.c.0.s8 %v1324
        %v1326 = vperm.slane %v1322, %v1325
        %v1327 = vrot.slane %v1263, 4
        %v1328 = vsel %vm586, %v1327, %v1261
        %v1330 = vunpack.c.l.s4 1983009808
        %v1331 = vunpack.c.0.s8 %v1330
        %v1332 = vperm.slane %v1328, %v1331
        %v1333 = vsel %vm586, %v1266, %v1255
        %v1335 = vunpack.c.l.s4 1983009808
        %v1336 = vunpack.c.0.s8 %v1335
        %v1337 = vperm.slane %v1333, %v1336
        %v1338 = vrot.slane %v1267, 4
        %v1339 = vsel %vm586, %v1338, %v1265
        %v1341 = vunpack.c.l.s4 1983009808
        %v1342 = vunpack.c.0.s8 %v1341
        %v1343 = vperm.slane %v1339, %v1342
        %v1344 = vrot.slane %v1332, 4
        %v1345 = vsel %vm586, %v1344, %v1326
        %v1346 = vrot.slane %v1326, 4
        %v1347 = vsel %vm586, %v1332, %v1346
        %v1349 = vunpack.c.l.s4 1934713408
        %v1350 = vunpack.c.0.s8 %v1349
        %v1351 = vperm.slane %v1345, %v1350
        %v1353 = vunpack.c.l.s4 1934713408
        %v1354 = vunpack.c.0.s8 %v1353
        %v1355 = vperm.slane %v1347, %v1354
        %v1356 = vrot.slane %v1343, 4
        %v1357 = vsel %vm586, %v1356, %v1337
        %v1358 = vrot.slane %v1337, 4
        %v1359 = vsel %vm586, %v1343, %v1358
        %v1361 = vunpack.c.l.s4 1934713408
        %v1362 = vunpack.c.0.s8 %v1361
        %v1363 = vperm.slane %v1357, %v1362
        %v1365 = vunpack.c.l.s4 1934713408
        %v1366 = vunpack.c.0.s8 %v1365
        %v1367 = vperm.slane %v1359, %v1366
        %v1368 = vrot.slane %v1363, 4
        %v1369 = vsel %vm586, %v1368, %v1351
        %v1370 = vrot.slane %v1351, 4
        %v1371 = vsel %vm586, %v1363, %v1370
        %v1372 = vrot.slane %v1367, 4
        %v1373 = vsel %vm586, %v1372, %v1355
        %v1374 = vrot.slane %v1355, 4
        %v1375 = vsel %vm586, %v1367, %v1374
        %1378 = vrot.lane.b32.xlu0 %v1317, 8
        %v1379 = vpop.permute.xlu0 %1378
        %1380 = vrot.lane.b32.xlu0 %v1371, 8
        %v1381 = vpop.permute.xlu0 %1380
        %1386 = vrot.lane.b32.xlu0 %v1319, 16
        %v1387 = vpop.permute.xlu0 %1386
        %1388 = vrot.lane.b32.xlu0 %v1373, 16
        %v1389 = vpop.permute.xlu0 %1388
        %1394 = vrot.lane.b32.xlu0 %v1321, 24
        %v1395 = vpop.permute.xlu0 %1394
        %1396 = vrot.lane.b32.xlu0 %v1375, 24
        %v1397 = vpop.permute.xlu0 %1396
        %v1400 = vsel %vm842, %v1315, %v1379
        %v1401 = vsel %vm842, %v1369, %v1381
        %v1402 = vsel %vm959, %v1400, %v1387
        %v1403 = vsel %vm959, %v1401, %v1389
        %vm1404 = vcmask 195584
        %v1405 = vsel %vm1404, %v1402, %v1395
        %v1406 = vsel %vm1404, %v1403, %v1397
        %v1407 = vpack.c.bf16 %v1406, %v1405
        %v1408 = vld [vmem:[%s495] sm:$0xf]
        %v1409 = vld [vmem:[%s495 + $0x4] sm:$0xf]
        %v1410 = vld [vmem:[%s495 + $0x8] sm:$0xf]
        %v1411 = vld [vmem:[%s495 + $0xc] sm:$0xf]
        %v1412 = vperm.slane %v526, 0
        %v1417 = vunpack.c.l.b16 %v1408
        %v1418 = vunpack.c.l.b16 %v1409
        %v1419 = vunpack.c.l.b16 %v1410
        %v1420 = vunpack.c.l.b16 %v1411
        %v1421 = vpack.c.b16 %v1418, %v1417
        %v1422 = vpack.c.b16 %v1420, %v1419
        %v1426 = vsel %vm547, %v1407, 0
        %1428 = vmatpush.bf16.msra.mxu0 0
        %1429 = vmatpush.bf16.msra.mxu0 0
        %1430 = vmatpush.bf16.msra.mxu0 0
        %1431 = vmatpush.bf16.msra.mxu0 0
        %1432 = vmatpush.bf16.msra.mxu0 0
        %1433 = vmatpush.bf16.msra.mxu0 0
        %1434 = vmatpush.bf16.msra.mxu0 %v1422
        %1435 = vmatpush.bf16.msra.mxu0 %v1421
        %1436 = vmatmul.bf16.gmra.mxu0 %v1426
        %v1437 = vpop.f32.mrf.mxu0
        %v1438 = vadd.f32 %v1412, %v1437
        %v1439 = vpop.f32.mrf.mxu0
        %v1440 = vadd.f32 %v1412, %v1439
        %1441 = vdwg.mxu0
        %v1442 = vadd.f32 %v521, %v1438
        %v1443 = vadd.f32 %v522, %v1440
        %v1444 = vsel %vm547, %v1442, 0.0
        %1445 = vadd.xlane.f32.xlu0 %v1444
        %v1446 = vpop.xlane.xlu0 %1445
        %v1447 = vsel %vm547, %v1443, 0.0
        %1448 = vadd.xlane.f32.xlu0 %v1447
        %v1449 = vpop.xlane.xlu0 %1448
        %v1450 = vrcp.pop 32.0
        %v1451 = vmul.f32 32.0, %v1450
        %v1452 = vsub.f32 1.0, %v1451
        %v1453 = vmul.f32 %v1450, %v1452
        %v1454 = vadd.f32 %v1450, %v1453
        %vm1455 = vweird.f32 %v1450
        %v1456 = vsel %vm1455, %v1450, %v1454
        %v1457 = vmul.f32 %v1446, %v1456
        %v1458 = vmul.f32 %v1449, %v1456
        %v1459 = vsub.f32 %v1442, %v1457
        %v1460 = vsub.f32 %v1443, %v1458
        %v1461 = vmul.f32 %v1459, %v1459
        %v1462 = vmul.f32 %v1460, %v1460
        %v1463 = vsel %vm547, %v1461, 0.0
        %1464 = vadd.xlane.f32.xlu0 %v1463
        %v1465 = vpop.xlane.xlu0 %1464
        %v1466 = vsel %vm547, %v1462, 0.0
        %1467 = vadd.xlane.f32.xlu0 %v1466
        %v1468 = vpop.xlane.xlu0 %1467
        %v1469 = vmul.f32 %v1465, %v1456
        %v1470 = vmul.f32 %v1468, %v1456
        %v1471 = vadd.f32 %v1469, 1e-05
        %v1472 = vadd.f32 %v1470, 1e-05
        %v1473 = vrsqrt.pop %v1471
        %v1474 = vmul.f32 %v1473, %v1471
        %v1475 = vmul.f32 %v1474, %v1473
        %v1476 = vmul.f32 0.5, %v1475
        %v1477 = vsub.f32 1.5, %v1476
        %v1478 = vmul.f32 %v1473, %v1477
        %vm1479 = vweird.f32 %v1471
        %vm1480 = vweird.f32 %v1473
        %vm1481 = vmor %vm1479, %vm1480
        %v1482 = vsel %vm1481, %v1473, %v1478
        %v1483 = vrsqrt.pop %v1472
        %v1484 = vmul.f32 %v1483, %v1472
        %v1485 = vmul.f32 %v1484, %v1483
        %v1486 = vmul.f32 0.5, %v1485
        %v1487 = vsub.f32 1.5, %v1486
        %v1488 = vmul.f32 %v1483, %v1487
        %vm1489 = vweird.f32 %v1472
        %vm1490 = vweird.f32 %v1483
        %vm1491 = vmor %vm1489, %vm1490
        %v1492 = vsel %vm1491, %v1483, %v1488
        %v1493 = vmul.f32 %v1459, %v1482
        %v1494 = vmul.f32 %v1460, %v1492
        %v1495 = vperm.slane %v526, 1
        %v1496 = vmul.f32 %v1493, %v1495
        %v1497 = vmul.f32 %v1494, %v1495
        %v1498 = vperm.slane %v526, 2
        %v1499 = vadd.f32 %v1496, %v1498
        %v1500 = vadd.f32 %v1497, %v1498
        %v1501 = vpack.c.bf16 %v1500, %v1499
        %v1502 = vld [vmem:[%s500] sm:$0xf]
        %v1503 = vld [vmem:[%s500 + $0x4] sm:$0xf]
        %v1504 = vld [vmem:[%s500 + $0x8] sm:$0xf]
        %v1505 = vld [vmem:[%s500 + $0xc] sm:$0xf]
        %v1506 = vld [vmem:[%s425] sm:$0x1]
        %v1508 = vperm.slane %v1506, 0
        %v1514 = vunpack.c.l.b16 %v1502
        %v1515 = vunpack.c.l.b16 %v1503
        %v1516 = vunpack.c.l.b16 %v1504
        %v1517 = vunpack.c.l.b16 %v1505
        %v1518 = vpack.c.b16 %v1515, %v1514
        %v1519 = vpack.c.b16 %v1517, %v1516
        %v1523 = vsel %vm547, %v1501, 0
        %1525 = vmatpush.bf16.msra.mxu0 0
        %1526 = vmatpush.bf16.msra.mxu0 0
        %1527 = vmatpush.bf16.msra.mxu0 0
        %1528 = vmatpush.bf16.msra.mxu0 0
        %1529 = vmatpush.bf16.msra.mxu0 0
        %1530 = vmatpush.bf16.msra.mxu0 0
        %1531 = vmatpush.bf16.msra.mxu0 %v1519
        %1532 = vmatpush.bf16.msra.mxu0 %v1518
        %1533 = vmatmul.bf16.gmra.mxu0 %v1523
        %v1534 = vpop.f32.mrf.mxu0
        %v1535 = vadd.f32 %v1508, %v1534
        %v1536 = vpop.f32.mrf.mxu0
        %v1537 = vadd.f32 %v1508, %v1536
        %1538 = vdwg.mxu0
        %v1539 = vmax.f32 %v1535, 0.0
        %v1540 = vmax.f32 %v1537, 0.0
        %v1541 = vpack.c.bf16 %v1540, %v1539
        %v1542 = vld [vmem:[%s505] sm:$0xf]
        %v1543 = vld [vmem:[%s505 + $0x4] sm:$0xf]
        %v1544 = vld [vmem:[%s505 + $0x8] sm:$0xf]
        %v1545 = vld [vmem:[%s505 + $0xc] sm:$0xf]
        %v1546 = vld [vmem:[%s505 + $0x10] sm:$0xf]
        %v1547 = vld [vmem:[%s505 + $0x14] sm:$0xf]
        %v1548 = vld [vmem:[%s505 + $0x18] sm:$0xf]
        %v1549 = vld [vmem:[%s505 + $0x1c] sm:$0xf]
        %v1550 = vperm.slane %v526, 3
        %v1559 = vunpack.c.l.b16 %v1542
        %v1560 = vunpack.c.l.b16 %v1543
        %v1561 = vunpack.c.l.b16 %v1544
        %v1562 = vunpack.c.l.b16 %v1545
        %v1563 = vunpack.c.l.b16 %v1546
        %v1564 = vunpack.c.l.b16 %v1547
        %v1565 = vunpack.c.l.b16 %v1548
        %v1566 = vunpack.c.l.b16 %v1549
        %v1567 = vpack.c.b16 %v1560, %v1559
        %v1568 = vpack.c.b16 %v1562, %v1561
        %v1569 = vpack.c.b16 %v1564, %v1563
        %v1570 = vpack.c.b16 %v1566, %v1565
        %vm1575 = vcmask 523264
        %v1577 = vsel %vm1575, %v1541, 0
        %1579 = vmatpush.bf16.msra.mxu0 0
        %1580 = vmatpush.bf16.msra.mxu0 0
        %1581 = vmatpush.bf16.msra.mxu0 0
        %1582 = vmatpush.bf16.msra.mxu0 0
        %1583 = vmatpush.bf16.msra.mxu0 %v1570
        %1584 = vmatpush.bf16.msra.mxu0 %v1569
        %1585 = vmatpush.bf16.msra.mxu0 %v1568
        %1586 = vmatpush.bf16.msra.mxu0 %v1567
        %1587 = vmatmul.bf16.gmra.mxu0 %v1577
        %v1588 = vpop.f32.mrf.mxu0
        %v1589 = vadd.f32 %v1550, %v1588
        %v1590 = vpop.f32.mrf.mxu0
        %v1591 = vadd.f32 %v1550, %v1590
        %1592 = vdwg.mxu0
        %v1593 = vadd.f32 %v1499, %v1589
        %v1594 = vadd.f32 %v1500, %v1591
        %v1595 = vsel %vm547, %v1593, 0.0
        %1596 = vadd.xlane.f32.xlu0 %v1595
        %v1597 = vpop.xlane.xlu0 %1596
        %v1598 = vsel %vm547, %v1594, 0.0
        %1599 = vadd.xlane.f32.xlu0 %v1598
        %v1600 = vpop.xlane.xlu0 %1599
        %v1601 = vmul.f32 %v1597, %v1456
        %v1602 = vmul.f32 %v1600, %v1456
        %v1603 = vsub.f32 %v1593, %v1601
        %v1604 = vsub.f32 %v1594, %v1602
        %v1605 = vmul.f32 %v1603, %v1603
        %v1606 = vmul.f32 %v1604, %v1604
        %v1607 = vsel %vm547, %v1605, 0.0
        %1608 = vadd.xlane.f32.xlu0 %v1607
        %v1609 = vpop.xlane.xlu0 %1608
        %v1610 = vsel %vm547, %v1606, 0.0
        %1611 = vadd.xlane.f32.xlu0 %v1610
        %v1612 = vpop.xlane.xlu0 %1611
        %v1613 = vmul.f32 %v1609, %v1456
        %v1614 = vmul.f32 %v1612, %v1456
        %v1615 = vadd.f32 %v1613, 1e-05
        %v1616 = vadd.f32 %v1614, 1e-05
        %v1617 = vrsqrt.pop %v1615
        %v1618 = vmul.f32 %v1617, %v1615
        %v1619 = vmul.f32 %v1618, %v1617
        %v1620 = vmul.f32 0.5, %v1619
        %v1621 = vsub.f32 1.5, %v1620
        %v1622 = vmul.f32 %v1617, %v1621
        %vm1623 = vweird.f32 %v1615
        %vm1624 = vweird.f32 %v1617
        %vm1625 = vmor %vm1623, %vm1624
        %v1626 = vsel %vm1625, %v1617, %v1622
        %v1627 = vrsqrt.pop %v1616
        %v1628 = vmul.f32 %v1627, %v1616
        %v1629 = vmul.f32 %v1628, %v1627
        %v1630 = vmul.f32 0.5, %v1629
        %v1631 = vsub.f32 1.5, %v1630
        %v1632 = vmul.f32 %v1627, %v1631
        %vm1633 = vweird.f32 %v1616
        %vm1634 = vweird.f32 %v1627
        %vm1635 = vmor %vm1633, %vm1634
        %v1636 = vsel %vm1635, %v1627, %v1632
        %v1637 = vmul.f32 %v1603, %v1626
        %v1638 = vmul.f32 %v1604, %v1636
        %v1639 = vperm.slane %v526, 4
        %v1640 = vmul.f32 %v1637, %v1639
        %v1641 = vmul.f32 %v1638, %v1639
        %v1642 = vperm.slane %v526, 5
        %v1643 = vadd.f32 %v1640, %v1642
        %v1644 = vadd.f32 %v1641, %v1642
        %1645 = vst.msk [vmem:[#allocation2] sm:$0xff] %vm547, %v1643
        %1646 = vst.msk [vmem:[#allocation2 + $0x8] sm:$0xff] %vm547, %v1644
        %p1647 = scmp.eq.s32.totalorder %s28, 1
        // Predicated region
        $region73: #{tpu_custom_call.1} parent=55 // pred_check
          %p1648 = pneg %p1647
        $region74: #{tpu_custom_call.1} parent=55 // pred_check_branch
          %1650 = sbr.rel (%p1648) target = $region76
        $region75: #{tpu_custom_call.1} parent=55 // pred_region
          %1651 = vst.msk [vmem:[#allocation9] sm:$0xff] %vm547, %v1643
          %1652 = vst.msk [vmem:[#allocation9 + $0x8] sm:$0xff] %vm547, %v1644
        $region76: #{tpu_custom_call.1} parent=55 // pred_fallthru
          _
        // Predicated region
        $region77: #{tpu_custom_call.1} parent=55 // pred_check
          %p1653 = pneg %p287
        $region78: #{tpu_custom_call.1} parent=55 // pred_check_branch
          %1655 = sbr.rel (%p1653) target = $region80
        $region79: #{tpu_custom_call.1} parent=55 // pred_region
          %s1656 = smul.u32 2, %s27
          %1658 = vsyncadd [#allocation5], 0
          %s1659 = smul.addr %s1656, 8
          %s1660 = scalar_lea.hbm %s9, %s1659
          %s1661 = sshll.u32 [#allocation9], 4
          %s1662 = int_to_ptr.vmem [resolvable:$true] %s1661
          %s1663 = sshll.u32 %s1660, 4
          %s1664 = int_to_ptr.hbm [resolvable:$true] %s1663
          %1669 = dma.vmem_to_hbm [thread:$0]  %s1662, 256, %s1664, [#allocation5], 128, 128, 8
        $region80: #{tpu_custom_call.1} parent=55 // pred_fallthru
          _
        // Predicated region
        $region81: #{tpu_custom_call.1} parent=55 // pred_check
          %p1670 = pneg %p287
        $region82: #{tpu_custom_call.1} parent=55 // pred_check_branch
          %1672 = sbr.rel (%p1670) target = $region84
        $region83: #{tpu_custom_call.1} parent=55 // pred_region
          %1674 = dma.done [#allocation5], 256
        $region84: #{tpu_custom_call.1} parent=55 // pred_fallthru
          _
      $region56: #{tpu_custom_call.1} parent=5 // pred_fallthru
        _
      %p1675 = scmp.le.s32.totalorder 2, %s18
      // Predicated region
      $region85: #{tpu_custom_call.1} parent=5 // pred_check
        %p1676 = pneg %p1675
      $region86: #{tpu_custom_call.1} parent=5 // pred_check_branch
        %1678 = sbr.rel (%p1676) target = $region88
      $region87: #{tpu_custom_call.1} parent=5 // pred_region
        %s1679 = ssub.s32 %s18, 2
      $region88: #{tpu_custom_call.1} parent=5 // pred_fallthru
        _
    $region6: #{tpu_custom_call.1} parent=1 // loop_footer
      %s22 = sadd.s32 1, %s18
    $region7: #{tpu_custom_call.1} parent=1 // loop_footer_branch
      %17 = sbr.rel target = $region3
    $region8: #{tpu_custom_call.1} parent=1 // loop_exit
      _
    %1680 = vsyncpa [#allocation4], 1
    %s1681 = scalar_lea.sflag [#allocation4], 1
    %1682 = vsyncpa %s1681, 1
    %1683 = vsyncpa [#allocation7], 1
    %1684 = vsyncpa [#allocation5], 1
    %s1685 = scalar_lea.sflag [#allocation5], 1
    %1686 = vsyncpa %s1685, 1

</llo_original>
